<compile_context>
chip_gen: v7x
topology: tpu7x:2x2x1
jax: 0.10.0
libtpu: 0.0.40
codegen_flags: <defaults>
</compile_context>

<pallas_src>
import jax
import jax.numpy as jnp
from jax.experimental import pallas as pl
from jax.experimental.pallas import tpu as pltpu

C_IN = 3
C_OUT = 6
K = 3


def _make_conv_kernel(B, H, W, OH, OW):
    HW = H * W
    # Number of padded patch columns per batch block that hold valid data:
    # the largest needed flat-output index is (OH-1)*W + (OW-1).
    SEG = (OH - 1) * W + OW            # = 222 for H=W=16, K=3
    KK = C_IN * K * K                  # 27

    def kernel(x_ref, w_ref, b_ref, o_ref, p_ref, a_ref):
        # x_ref: (B, C_IN, H*W)        f32  VMEM
        # w_ref: (C_OUT, 27)           f32  VMEM
        # b_ref: (C_OUT, 1)            f32  VMEM
        # o_ref: (B, C_OUT, OH*OW)     f32  VMEM (reshaped to NCHW for free outside)
        # p_ref: (27, B*H*W)           f32  VMEM scratch — padded im2col matrix
        # a_ref: (C_OUT, B*H*W)        f32  VMEM scratch — lane-dense matmul result

        # 1) Zero the padded patch matrix once (gap/pad columns stay 0 and are
        #    never read back; this just keeps uninitialized VMEM out of the MXU).
        p_ref[...] = jnp.zeros_like(p_ref)

        # 2) In-kernel im2col.  With the W-strided column packing
        #      p[r, b*HW + oh*W + ow] = x_flat[b, ci, (oh+kh)*W + (ow+kw)]
        #    patch row r=(ci*K+kh)*K+kw is simply the flattened input plane
        #    shifted left by s = kh*W + kw  ->  one static-offset copy per
        #    (batch, tap): 27*B copies total.  (Max source index SEG-1+s = HW-1.)
        for bi in range(B):
            for ci in range(C_IN):
                for kh in range(K):
                    for kw in range(K):
                        r = (ci * K + kh) * K + kw
                        s = kh * W + kw
                        p_ref[r:r + 1, pl.ds(bi * HW, SEG)] = (
                            x_ref[bi, ci:ci + 1, pl.ds(s, SEG)])

        # 3) Single MXU matmul (C_OUT, 27) x (27, B*HW) with f32 accumulation,
        #    bias added exactly once.  N = B*HW is a multiple of 128.
        acc = jnp.dot(w_ref[...], p_ref[...], preferred_element_type=jnp.float32)
        a_ref[...] = (acc + b_ref[...]).astype(a_ref.dtype)

        # 4) Compact the valid columns (ow < OW) into the dense (B, C_OUT, OH*OW)
        #    output.  28 tiny static-offset row copies — cheaper than a separate
        #    XLA transpose dispatch.
        for bi in range(B):
            for oh in range(OH):
                o_ref[bi, :, pl.ds(oh * OW, OW)] = (
                    a_ref[:, pl.ds(bi * HW + oh * W, OW)].astype(o_ref.dtype))

    return kernel, KK, HW


def conv2d_pallas(x, w, b):
    """x: (B, 3, H, W) f32, w: (6, 3, 3, 3) f32, b: (6,) f32 -> (B, 6, H-2, W-2)."""
    B, C, H, W = x.shape
    assert C == C_IN
    OH, OW = H - K + 1, W - K + 1

    kernel, KK, HW = _make_conv_kernel(B, H, W, OH, OW)

    # All wrapper-side ops below are contiguous reshapes (bitcasts) — no extra
    # XLA kernel launches around the single pallas_call.
    x_flat = x.reshape(B, C_IN, HW)
    w2d = w.reshape(C_OUT, KK)
    b2d = b.reshape(C_OUT, 1)

    out3 = pl.pallas_call(
        kernel,
        out_shape=jax.ShapeDtypeStruct((B, C_OUT, OH * OW), x.dtype),
        in_specs=[
            pl.BlockSpec(memory_space=pltpu.MemorySpace.VMEM),
            pl.BlockSpec(memory_space=pltpu.MemorySpace.VMEM),
            pl.BlockSpec(memory_space=pltpu.MemorySpace.VMEM),
        ],
        out_specs=pl.BlockSpec(memory_space=pltpu.MemorySpace.VMEM),
        scratch_shapes=[
            pltpu.VMEM((KK, B * HW), jnp.float32),      # padded im2col matrix
            pltpu.VMEM((C_OUT, B * HW), jnp.float32),   # lane-dense matmul result
        ],
    )(x_flat, w2d, b2d)

    return out3.reshape(B, C_OUT, OH, OW)   # free contiguous split


def conv2d_reference(x, w, b):
    out = jax.lax.conv_general_dilated(
        x, w, window_strides=(1, 1), padding="VALID",
        dimension_numbers=("NCHW", "OIHW", "NCHW"))
    return out + b[None, :, None, None]


if __name__ == "__main__":
    key = jax.random.PRNGKey(0)
    kx, kw_, kb = jax.random.split(key, 3)

    B, H, W = 2, 16, 16
    x = jax.random.normal(kx, (B, C_IN, H, W), dtype=jnp.float32)

    # Deterministic parameter init mimicking PyTorch Conv2d default:
    # U(-1/sqrt(fan_in), 1/sqrt(fan_in)), fan_in = C_IN * K * K = 27.
    bound = 1.0 / jnp.sqrt(jnp.float32(C_IN * K * K))
    w = jax.random.uniform(kw_, (C_OUT, C_IN, K, K), jnp.float32, -bound, bound)
    b = jax.random.uniform(kb, (C_OUT,), jnp.float32, -bound, bound)

    out = jax.jit(conv2d_pallas)(x, w, b)
    out = jax.block_until_ready(out)

    ref = conv2d_reference(x, w, b)
    assert out.shape == (B, C_OUT, H - 2, W - 2), out.shape
    assert jnp.allclose(out, ref, atol=1e-5, rtol=1e-5), "mismatch vs lax reference"

    print("KERNEL_OK")
</pallas_src>

<mosaic_0001>
module attributes {stable_mosaic.version = 11 : i64} {
  func.func @kernel(%arg0: memref<2x3x256xf32, #tpu.memory_space<vmem>>, %arg1: memref<6x27xf32, #tpu.memory_space<vmem>>, %arg2: memref<6x1xf32, #tpu.memory_space<vmem>>, %arg3: memref<2x6x196xf32, #tpu.memory_space<vmem>>, %arg4: memref<27x512xf32, #tpu.memory_space<vmem>>, %arg5: memref<6x512xf32, #tpu.memory_space<vmem>>) attributes {dimension_semantics = [], scalar_prefetch = 0 : i64, scratch_operands = 2 : i64, tpu.core_type = #tpu.core_type<tc>} {
    %cst = arith.constant 0.000000e+00 : f32
    %0 = vector.broadcast %cst : f32 to vector<27x512xf32>
    %c0 = arith.constant 0 : index
    %c0_0 = arith.constant 0 : index
    %1 = vector.load %arg4[%c0, %c0_0] : memref<27x512xf32, #tpu.memory_space<vmem>>, vector<27x512xf32>
    tpu.vector_store %arg4[%c0, %c0_0], %0 {strides = array<i32>} : memref<27x512xf32, #tpu.memory_space<vmem>>, vector<27x512xf32>,
    %c0_1 = arith.constant 0 : index
    %c0_2 = arith.constant 0 : index
    %c0_3 = arith.constant 0 : index
    %2 = vector.load %arg0[%c0_1, %c0_2, %c0_3] : memref<2x3x256xf32, #tpu.memory_space<vmem>>, vector<1x1x222xf32>
    %3 = vector.shape_cast %2 : vector<1x1x222xf32> to vector<1x222xf32>
    %c0_4 = arith.constant 0 : index
    %c0_5 = arith.constant 0 : index
    %4 = vector.load %arg4[%c0_4, %c0_5] : memref<27x512xf32, #tpu.memory_space<vmem>>, vector<1x222xf32>
    tpu.vector_store %arg4[%c0_4, %c0_5], %3 {strides = array<i32>} : memref<27x512xf32, #tpu.memory_space<vmem>>, vector<1x222xf32>,
    %c0_6 = arith.constant 0 : index
    %c0_7 = arith.constant 0 : index
    %c1 = arith.constant 1 : index
    %5 = vector.load %arg0[%c0_6, %c0_7, %c1] : memref<2x3x256xf32, #tpu.memory_space<vmem>>, vector<1x1x222xf32>
    %6 = vector.shape_cast %5 : vector<1x1x222xf32> to vector<1x222xf32>
    %c1_8 = arith.constant 1 : index
    %c0_9 = arith.constant 0 : index
    %7 = vector.load %arg4[%c1_8, %c0_9] : memref<27x512xf32, #tpu.memory_space<vmem>>, vector<1x222xf32>
    tpu.vector_store %arg4[%c1_8, %c0_9], %6 {strides = array<i32>} : memref<27x512xf32, #tpu.memory_space<vmem>>, vector<1x222xf32>,
    %c0_10 = arith.constant 0 : index
    %c0_11 = arith.constant 0 : index
    %c2 = arith.constant 2 : index
    %8 = vector.load %arg0[%c0_10, %c0_11, %c2] : memref<2x3x256xf32, #tpu.memory_space<vmem>>, vector<1x1x222xf32>
    %9 = vector.shape_cast %8 : vector<1x1x222xf32> to vector<1x222xf32>
    %c2_12 = arith.constant 2 : index
    %c0_13 = arith.constant 0 : index
    %10 = vector.load %arg4[%c2_12, %c0_13] : memref<27x512xf32, #tpu.memory_space<vmem>>, vector<1x222xf32>
    tpu.vector_store %arg4[%c2_12, %c0_13], %9 {strides = array<i32>} : memref<27x512xf32, #tpu.memory_space<vmem>>, vector<1x222xf32>,
    %c0_14 = arith.constant 0 : index
    %c0_15 = arith.constant 0 : index
    %c16 = arith.constant 16 : index
    %11 = vector.load %arg0[%c0_14, %c0_15, %c16] : memref<2x3x256xf32, #tpu.memory_space<vmem>>, vector<1x1x222xf32>
    %12 = vector.shape_cast %11 : vector<1x1x222xf32> to vector<1x222xf32>
    %c3 = arith.constant 3 : index
    %c0_16 = arith.constant 0 : index
    %13 = vector.load %arg4[%c3, %c0_16] : memref<27x512xf32, #tpu.memory_space<vmem>>, vector<1x222xf32>
    tpu.vector_store %arg4[%c3, %c0_16], %12 {strides = array<i32>} : memref<27x512xf32, #tpu.memory_space<vmem>>, vector<1x222xf32>,
    %c0_17 = arith.constant 0 : index
    %c0_18 = arith.constant 0 : index
    %c17 = arith.constant 17 : index
    %14 = vector.load %arg0[%c0_17, %c0_18, %c17] : memref<2x3x256xf32, #tpu.memory_space<vmem>>, vector<1x1x222xf32>
    %15 = vector.shape_cast %14 : vector<1x1x222xf32> to vector<1x222xf32>
    %c4 = arith.constant 4 : index
    %c0_19 = arith.constant 0 : index
    %16 = vector.load %arg4[%c4, %c0_19] : memref<27x512xf32, #tpu.memory_space<vmem>>, vector<1x222xf32>
    tpu.vector_store %arg4[%c4, %c0_19], %15 {strides = array<i32>} : memref<27x512xf32, #tpu.memory_space<vmem>>, vector<1x222xf32>,
    %c0_20 = arith.constant 0 : index
    %c0_21 = arith.constant 0 : index
    %c18 = arith.constant 18 : index
    %17 = vector.load %arg0[%c0_20, %c0_21, %c18] : memref<2x3x256xf32, #tpu.memory_space<vmem>>, vector<1x1x222xf32>
    %18 = vector.shape_cast %17 : vector<1x1x222xf32> to vector<1x222xf32>
    %c5 = arith.constant 5 : index
    %c0_22 = arith.constant 0 : index
    %19 = vector.load %arg4[%c5, %c0_22] : memref<27x512xf32, #tpu.memory_space<vmem>>, vector<1x222xf32>
    tpu.vector_store %arg4[%c5, %c0_22], %18 {strides = array<i32>} : memref<27x512xf32, #tpu.memory_space<vmem>>, vector<1x222xf32>,
    %c0_23 = arith.constant 0 : index
    %c0_24 = arith.constant 0 : index
    %c32 = arith.constant 32 : index
    %20 = vector.load %arg0[%c0_23, %c0_24, %c32] : memref<2x3x256xf32, #tpu.memory_space<vmem>>, vector<1x1x222xf32>
    %21 = vector.shape_cast %20 : vector<1x1x222xf32> to vector<1x222xf32>
    %c6 = arith.constant 6 : index
    %c0_25 = arith.constant 0 : index
    %22 = vector.load %arg4[%c6, %c0_25] : memref<27x512xf32, #tpu.memory_space<vmem>>, vector<1x222xf32>
    tpu.vector_store %arg4[%c6, %c0_25], %21 {strides = array<i32>} : memref<27x512xf32, #tpu.memory_space<vmem>>, vector<1x222xf32>,
    %c0_26 = arith.constant 0 : index
    %c0_27 = arith.constant 0 : index
    %c33 = arith.constant 33 : index
    %23 = vector.load %arg0[%c0_26, %c0_27, %c33] : memref<2x3x256xf32, #tpu.memory_space<vmem>>, vector<1x1x222xf32>
    %24 = vector.shape_cast %23 : vector<1x1x222xf32> to vector<1x222xf32>
    %c7 = arith.constant 7 : index
    %c0_28 = arith.constant 0 : index
    %25 = vector.load %arg4[%c7, %c0_28] : memref<27x512xf32, #tpu.memory_space<vmem>>, vector<1x222xf32>
    tpu.vector_store %arg4[%c7, %c0_28], %24 {strides = array<i32>} : memref<27x512xf32, #tpu.memory_space<vmem>>, vector<1x222xf32>,
    %c0_29 = arith.constant 0 : index
    %c0_30 = arith.constant 0 : index
    %c34 = arith.constant 34 : index
    %26 = vector.load %arg0[%c0_29, %c0_30, %c34] : memref<2x3x256xf32, #tpu.memory_space<vmem>>, vector<1x1x222xf32>
    %27 = vector.shape_cast %26 : vector<1x1x222xf32> to vector<1x222xf32>
    %c8 = arith.constant 8 : index
    %c0_31 = arith.constant 0 : index
    %28 = vector.load %arg4[%c8, %c0_31] : memref<27x512xf32, #tpu.memory_space<vmem>>, vector<1x222xf32>
    tpu.vector_store %arg4[%c8, %c0_31], %27 {strides = array<i32>} : memref<27x512xf32, #tpu.memory_space<vmem>>, vector<1x222xf32>,
    %c0_32 = arith.constant 0 : index
    %c1_33 = arith.constant 1 : index
    %c0_34 = arith.constant 0 : index
    %29 = vector.load %arg0[%c0_32, %c1_33, %c0_34] : memref<2x3x256xf32, #tpu.memory_space<vmem>>, vector<1x1x222xf32>
    %30 = vector.shape_cast %29 : vector<1x1x222xf32> to vector<1x222xf32>
    %c9 = arith.constant 9 : index
    %c0_35 = arith.constant 0 : index
    %31 = vector.load %arg4[%c9, %c0_35] : memref<27x512xf32, #tpu.memory_space<vmem>>, vector<1x222xf32>
    tpu.vector_store %arg4[%c9, %c0_35], %30 {strides = array<i32>} : memref<27x512xf32, #tpu.memory_space<vmem>>, vector<1x222xf32>,
    %c0_36 = arith.constant 0 : index
    %c1_37 = arith.constant 1 : index
    %c1_38 = arith.constant 1 : index
    %32 = vector.load %arg0[%c0_36, %c1_37, %c1_38] : memref<2x3x256xf32, #tpu.memory_space<vmem>>, vector<1x1x222xf32>
    %33 = vector.shape_cast %32 : vector<1x1x222xf32> to vector<1x222xf32>
    %c10 = arith.constant 10 : index
    %c0_39 = arith.constant 0 : index
    %34 = vector.load %arg4[%c10, %c0_39] : memref<27x512xf32, #tpu.memory_space<vmem>>, vector<1x222xf32>
    tpu.vector_store %arg4[%c10, %c0_39], %33 {strides = array<i32>} : memref<27x512xf32, #tpu.memory_space<vmem>>, vector<1x222xf32>,
    %c0_40 = arith.constant 0 : index
    %c1_41 = arith.constant 1 : index
    %c2_42 = arith.constant 2 : index
    %35 = vector.load %arg0[%c0_40, %c1_41, %c2_42] : memref<2x3x256xf32, #tpu.memory_space<vmem>>, vector<1x1x222xf32>
    %36 = vector.shape_cast %35 : vector<1x1x222xf32> to vector<1x222xf32>
    %c11 = arith.constant 11 : index
    %c0_43 = arith.constant 0 : index
    %37 = vector.load %arg4[%c11, %c0_43] : memref<27x512xf32, #tpu.memory_space<vmem>>, vector<1x222xf32>
    tpu.vector_store %arg4[%c11, %c0_43], %36 {strides = array<i32>} : memref<27x512xf32, #tpu.memory_space<vmem>>, vector<1x222xf32>,
    %c0_44 = arith.constant 0 : index
    %c1_45 = arith.constant 1 : index
    %c16_46 = arith.constant 16 : index
    %38 = vector.load %arg0[%c0_44, %c1_45, %c16_46] : memref<2x3x256xf32, #tpu.memory_space<vmem>>, vector<1x1x222xf32>
    %39 = vector.shape_cast %38 : vector<1x1x222xf32> to vector<1x222xf32>
    %c12 = arith.constant 12 : index
    %c0_47 = arith.constant 0 : index
    %40 = vector.load %arg4[%c12, %c0_47] : memref<27x512xf32, #tpu.memory_space<vmem>>, vector<1x222xf32>
    tpu.vector_store %arg4[%c12, %c0_47], %39 {strides = array<i32>} : memref<27x512xf32, #tpu.memory_space<vmem>>, vector<1x222xf32>,
    %c0_48 = arith.constant 0 : index
    %c1_49 = arith.constant 1 : index
    %c17_50 = arith.constant 17 : index
    %41 = vector.load %arg0[%c0_48, %c1_49, %c17_50] : memref<2x3x256xf32, #tpu.memory_space<vmem>>, vector<1x1x222xf32>
    %42 = vector.shape_cast %41 : vector<1x1x222xf32> to vector<1x222xf32>
    %c13 = arith.constant 13 : index
    %c0_51 = arith.constant 0 : index
    %43 = vector.load %arg4[%c13, %c0_51] : memref<27x512xf32, #tpu.memory_space<vmem>>, vector<1x222xf32>
    tpu.vector_store %arg4[%c13, %c0_51], %42 {strides = array<i32>} : memref<27x512xf32, #tpu.memory_space<vmem>>, vector<1x222xf32>,
    %c0_52 = arith.constant 0 : index
    %c1_53 = arith.constant 1 : index
    %c18_54 = arith.constant 18 : index
    %44 = vector.load %arg0[%c0_52, %c1_53, %c18_54] : memref<2x3x256xf32, #tpu.memory_space<vmem>>, vector<1x1x222xf32>
    %45 = vector.shape_cast %44 : vector<1x1x222xf32> to vector<1x222xf32>
    %c14 = arith.constant 14 : index
    %c0_55 = arith.constant 0 : index
    %46 = vector.load %arg4[%c14, %c0_55] : memref<27x512xf32, #tpu.memory_space<vmem>>, vector<1x222xf32>
    tpu.vector_store %arg4[%c14, %c0_55], %45 {strides = array<i32>} : memref<27x512xf32, #tpu.memory_space<vmem>>, vector<1x222xf32>,
    %c0_56 = arith.constant 0 : index
    %c1_57 = arith.constant 1 : index
    %c32_58 = arith.constant 32 : index
    %47 = vector.load %arg0[%c0_56, %c1_57, %c32_58] : memref<2x3x256xf32, #tpu.memory_space<vmem>>, vector<1x1x222xf32>
    %48 = vector.shape_cast %47 : vector<1x1x222xf32> to vector<1x222xf32>
    %c15 = arith.constant 15 : index
    %c0_59 = arith.constant 0 : index
    %49 = vector.load %arg4[%c15, %c0_59] : memref<27x512xf32, #tpu.memory_space<vmem>>, vector<1x222xf32>
    tpu.vector_store %arg4[%c15, %c0_59], %48 {strides = array<i32>} : memref<27x512xf32, #tpu.memory_space<vmem>>, vector<1x222xf32>,
    %c0_60 = arith.constant 0 : index
    %c1_61 = arith.constant 1 : index
    %c33_62 = arith.constant 33 : index
    %50 = vector.load %arg0[%c0_60, %c1_61, %c33_62] : memref<2x3x256xf32, #tpu.memory_space<vmem>>, vector<1x1x222xf32>
    %51 = vector.shape_cast %50 : vector<1x1x222xf32> to vector<1x222xf32>
    %c16_63 = arith.constant 16 : index
    %c0_64 = arith.constant 0 : index
    %52 = vector.load %arg4[%c16_63, %c0_64] : memref<27x512xf32, #tpu.memory_space<vmem>>, vector<1x222xf32>
    tpu.vector_store %arg4[%c16_63, %c0_64], %51 {strides = array<i32>} : memref<27x512xf32, #tpu.memory_space<vmem>>, vector<1x222xf32>,
    %c0_65 = arith.constant 0 : index
    %c1_66 = arith.constant 1 : index
    %c34_67 = arith.constant 34 : index
    %53 = vector.load %arg0[%c0_65, %c1_66, %c34_67] : memref<2x3x256xf32, #tpu.memory_space<vmem>>, vector<1x1x222xf32>
    %54 = vector.shape_cast %53 : vector<1x1x222xf32> to vector<1x222xf32>
    %c17_68 = arith.constant 17 : index
    %c0_69 = arith.constant 0 : index
    %55 = vector.load %arg4[%c17_68, %c0_69] : memref<27x512xf32, #tpu.memory_space<vmem>>, vector<1x222xf32>
    tpu.vector_store %arg4[%c17_68, %c0_69], %54 {strides = array<i32>} : memref<27x512xf32, #tpu.memory_space<vmem>>, vector<1x222xf32>,
    %c0_70 = arith.constant 0 : index
    %c2_71 = arith.constant 2 : index
    %c0_72 = arith.constant 0 : index
    %56 = vector.load %arg0[%c0_70, %c2_71, %c0_72] : memref<2x3x256xf32, #tpu.memory_space<vmem>>, vector<1x1x222xf32>
    %57 = vector.shape_cast %56 : vector<1x1x222xf32> to vector<1x222xf32>
    %c18_73 = arith.constant 18 : index
    %c0_74 = arith.constant 0 : index
    %58 = vector.load %arg4[%c18_73, %c0_74] : memref<27x512xf32, #tpu.memory_space<vmem>>, vector<1x222xf32>
    tpu.vector_store %arg4[%c18_73, %c0_74], %57 {strides = array<i32>} : memref<27x512xf32, #tpu.memory_space<vmem>>, vector<1x222xf32>,
    %c0_75 = arith.constant 0 : index
    %c2_76 = arith.constant 2 : index
    %c1_77 = arith.constant 1 : index
    %59 = vector.load %arg0[%c0_75, %c2_76, %c1_77] : memref<2x3x256xf32, #tpu.memory_space<vmem>>, vector<1x1x222xf32>
    %60 = vector.shape_cast %59 : vector<1x1x222xf32> to vector<1x222xf32>
    %c19 = arith.constant 19 : index
    %c0_78 = arith.constant 0 : index
    %61 = vector.load %arg4[%c19, %c0_78] : memref<27x512xf32, #tpu.memory_space<vmem>>, vector<1x222xf32>
    tpu.vector_store %arg4[%c19, %c0_78], %60 {strides = array<i32>} : memref<27x512xf32, #tpu.memory_space<vmem>>, vector<1x222xf32>,
    %c0_79 = arith.constant 0 : index
    %c2_80 = arith.constant 2 : index
    %c2_81 = arith.constant 2 : index
    %62 = vector.load %arg0[%c0_79, %c2_80, %c2_81] : memref<2x3x256xf32, #tpu.memory_space<vmem>>, vector<1x1x222xf32>
    %63 = vector.shape_cast %62 : vector<1x1x222xf32> to vector<1x222xf32>
    %c20 = arith.constant 20 : index
    %c0_82 = arith.constant 0 : index
    %64 = vector.load %arg4[%c20, %c0_82] : memref<27x512xf32, #tpu.memory_space<vmem>>, vector<1x222xf32>
    tpu.vector_store %arg4[%c20, %c0_82], %63 {strides = array<i32>} : memref<27x512xf32, #tpu.memory_space<vmem>>, vector<1x222xf32>,
    %c0_83 = arith.constant 0 : index
    %c2_84 = arith.constant 2 : index
    %c16_85 = arith.constant 16 : index
    %65 = vector.load %arg0[%c0_83, %c2_84, %c16_85] : memref<2x3x256xf32, #tpu.memory_space<vmem>>, vector<1x1x222xf32>
    %66 = vector.shape_cast %65 : vector<1x1x222xf32> to vector<1x222xf32>
    %c21 = arith.constant 21 : index
    %c0_86 = arith.constant 0 : index
    %67 = vector.load %arg4[%c21, %c0_86] : memref<27x512xf32, #tpu.memory_space<vmem>>, vector<1x222xf32>
    tpu.vector_store %arg4[%c21, %c0_86], %66 {strides = array<i32>} : memref<27x512xf32, #tpu.memory_space<vmem>>, vector<1x222xf32>,
    %c0_87 = arith.constant 0 : index
    %c2_88 = arith.constant 2 : index
    %c17_89 = arith.constant 17 : index
    %68 = vector.load %arg0[%c0_87, %c2_88, %c17_89] : memref<2x3x256xf32, #tpu.memory_space<vmem>>, vector<1x1x222xf32>
    %69 = vector.shape_cast %68 : vector<1x1x222xf32> to vector<1x222xf32>
    %c22 = arith.constant 22 : index
    %c0_90 = arith.constant 0 : index
    %70 = vector.load %arg4[%c22, %c0_90] : memref<27x512xf32, #tpu.memory_space<vmem>>, vector<1x222xf32>
    tpu.vector_store %arg4[%c22, %c0_90], %69 {strides = array<i32>} : memref<27x512xf32, #tpu.memory_space<vmem>>, vector<1x222xf32>,
    %c0_91 = arith.constant 0 : index
    %c2_92 = arith.constant 2 : index
    %c18_93 = arith.constant 18 : index
    %71 = vector.load %arg0[%c0_91, %c2_92, %c18_93] : memref<2x3x256xf32, #tpu.memory_space<vmem>>, vector<1x1x222xf32>
    %72 = vector.shape_cast %71 : vector<1x1x222xf32> to vector<1x222xf32>
    %c23 = arith.constant 23 : index
    %c0_94 = arith.constant 0 : index
    %73 = vector.load %arg4[%c23, %c0_94] : memref<27x512xf32, #tpu.memory_space<vmem>>, vector<1x222xf32>
    tpu.vector_store %arg4[%c23, %c0_94], %72 {strides = array<i32>} : memref<27x512xf32, #tpu.memory_space<vmem>>, vector<1x222xf32>,
    %c0_95 = arith.constant 0 : index
    %c2_96 = arith.constant 2 : index
    %c32_97 = arith.constant 32 : index
    %74 = vector.load %arg0[%c0_95, %c2_96, %c32_97] : memref<2x3x256xf32, #tpu.memory_space<vmem>>, vector<1x1x222xf32>
    %75 = vector.shape_cast %74 : vector<1x1x222xf32> to vector<1x222xf32>
    %c24 = arith.constant 24 : index
    %c0_98 = arith.constant 0 : index
    %76 = vector.load %arg4[%c24, %c0_98] : memref<27x512xf32, #tpu.memory_space<vmem>>, vector<1x222xf32>
    tpu.vector_store %arg4[%c24, %c0_98], %75 {strides = array<i32>} : memref<27x512xf32, #tpu.memory_space<vmem>>, vector<1x222xf32>,
    %c0_99 = arith.constant 0 : index
    %c2_100 = arith.constant 2 : index
    %c33_101 = arith.constant 33 : index
    %77 = vector.load %arg0[%c0_99, %c2_100, %c33_101] : memref<2x3x256xf32, #tpu.memory_space<vmem>>, vector<1x1x222xf32>
    %78 = vector.shape_cast %77 : vector<1x1x222xf32> to vector<1x222xf32>
    %c25 = arith.constant 25 : index
    %c0_102 = arith.constant 0 : index
    %79 = vector.load %arg4[%c25, %c0_102] : memref<27x512xf32, #tpu.memory_space<vmem>>, vector<1x222xf32>
    tpu.vector_store %arg4[%c25, %c0_102], %78 {strides = array<i32>} : memref<27x512xf32, #tpu.memory_space<vmem>>, vector<1x222xf32>,
    %c0_103 = arith.constant 0 : index
    %c2_104 = arith.constant 2 : index
    %c34_105 = arith.constant 34 : index
    %80 = vector.load %arg0[%c0_103, %c2_104, %c34_105] : memref<2x3x256xf32, #tpu.memory_space<vmem>>, vector<1x1x222xf32>
    %81 = vector.shape_cast %80 : vector<1x1x222xf32> to vector<1x222xf32>
    %c26 = arith.constant 26 : index
    %c0_106 = arith.constant 0 : index
    %82 = vector.load %arg4[%c26, %c0_106] : memref<27x512xf32, #tpu.memory_space<vmem>>, vector<1x222xf32>
    tpu.vector_store %arg4[%c26, %c0_106], %81 {strides = array<i32>} : memref<27x512xf32, #tpu.memory_space<vmem>>, vector<1x222xf32>,
    %c1_107 = arith.constant 1 : index
    %c0_108 = arith.constant 0 : index
    %c0_109 = arith.constant 0 : index
    %83 = vector.load %arg0[%c1_107, %c0_108, %c0_109] : memref<2x3x256xf32, #tpu.memory_space<vmem>>, vector<1x1x222xf32>
    %84 = vector.shape_cast %83 : vector<1x1x222xf32> to vector<1x222xf32>
    %c0_110 = arith.constant 0 : index
    %c256 = arith.constant 256 : index
    %85 = vector.load %arg4[%c0_110, %c256] : memref<27x512xf32, #tpu.memory_space<vmem>>, vector<1x222xf32>
    tpu.vector_store %arg4[%c0_110, %c256], %84 {strides = array<i32>} : memref<27x512xf32, #tpu.memory_space<vmem>>, vector<1x222xf32>,
    %c1_111 = arith.constant 1 : index
    %c0_112 = arith.constant 0 : index
    %c1_113 = arith.constant 1 : index
    %86 = vector.load %arg0[%c1_111, %c0_112, %c1_113] : memref<2x3x256xf32, #tpu.memory_space<vmem>>, vector<1x1x222xf32>
    %87 = vector.shape_cast %86 : vector<1x1x222xf32> to vector<1x222xf32>
    %c1_114 = arith.constant 1 : index
    %c256_115 = arith.constant 256 : index
    %88 = vector.load %arg4[%c1_114, %c256_115] : memref<27x512xf32, #tpu.memory_space<vmem>>, vector<1x222xf32>
    tpu.vector_store %arg4[%c1_114, %c256_115], %87 {strides = array<i32>} : memref<27x512xf32, #tpu.memory_space<vmem>>, vector<1x222xf32>,
    %c1_116 = arith.constant 1 : index
    %c0_117 = arith.constant 0 : index
    %c2_118 = arith.constant 2 : index
    %89 = vector.load %arg0[%c1_116, %c0_117, %c2_118] : memref<2x3x256xf32, #tpu.memory_space<vmem>>, vector<1x1x222xf32>
    %90 = vector.shape_cast %89 : vector<1x1x222xf32> to vector<1x222xf32>
    %c2_119 = arith.constant 2 : index
    %c256_120 = arith.constant 256 : index
    %91 = vector.load %arg4[%c2_119, %c256_120] : memref<27x512xf32, #tpu.memory_space<vmem>>, vector<1x222xf32>
    tpu.vector_store %arg4[%c2_119, %c256_120], %90 {strides = array<i32>} : memref<27x512xf32, #tpu.memory_space<vmem>>, vector<1x222xf32>,
    %c1_121 = arith.constant 1 : index
    %c0_122 = arith.constant 0 : index
    %c16_123 = arith.constant 16 : index
    %92 = vector.load %arg0[%c1_121, %c0_122, %c16_123] : memref<2x3x256xf32, #tpu.memory_space<vmem>>, vector<1x1x222xf32>
    %93 = vector.shape_cast %92 : vector<1x1x222xf32> to vector<1x222xf32>
    %c3_124 = arith.constant 3 : index
    %c256_125 = arith.constant 256 : index
    %94 = vector.load %arg4[%c3_124, %c256_125] : memref<27x512xf32, #tpu.memory_space<vmem>>, vector<1x222xf32>
    tpu.vector_store %arg4[%c3_124, %c256_125], %93 {strides = array<i32>} : memref<27x512xf32, #tpu.memory_space<vmem>>, vector<1x222xf32>,
    %c1_126 = arith.constant 1 : index
    %c0_127 = arith.constant 0 : index
    %c17_128 = arith.constant 17 : index
    %95 = vector.load %arg0[%c1_126, %c0_127, %c17_128] : memref<2x3x256xf32, #tpu.memory_space<vmem>>, vector<1x1x222xf32>
    %96 = vector.shape_cast %95 : vector<1x1x222xf32> to vector<1x222xf32>
    %c4_129 = arith.constant 4 : index
    %c256_130 = arith.constant 256 : index
    %97 = vector.load %arg4[%c4_129, %c256_130] : memref<27x512xf32, #tpu.memory_space<vmem>>, vector<1x222xf32>
    tpu.vector_store %arg4[%c4_129, %c256_130], %96 {strides = array<i32>} : memref<27x512xf32, #tpu.memory_space<vmem>>, vector<1x222xf32>,
    %c1_131 = arith.constant 1 : index
    %c0_132 = arith.constant 0 : index
    %c18_133 = arith.constant 18 : index
    %98 = vector.load %arg0[%c1_131, %c0_132, %c18_133] : memref<2x3x256xf32, #tpu.memory_space<vmem>>, vector<1x1x222xf32>
    %99 = vector.shape_cast %98 : vector<1x1x222xf32> to vector<1x222xf32>
    %c5_134 = arith.constant 5 : index
    %c256_135 = arith.constant 256 : index
    %100 = vector.load %arg4[%c5_134, %c256_135] : memref<27x512xf32, #tpu.memory_space<vmem>>, vector<1x222xf32>
    tpu.vector_store %arg4[%c5_134, %c256_135], %99 {strides = array<i32>} : memref<27x512xf32, #tpu.memory_space<vmem>>, vector<1x222xf32>,
    %c1_136 = arith.constant 1 : index
    %c0_137 = arith.constant 0 : index
    %c32_138 = arith.constant 32 : index
    %101 = vector.load %arg0[%c1_136, %c0_137, %c32_138] : memref<2x3x256xf32, #tpu.memory_space<vmem>>, vector<1x1x222xf32>
    %102 = vector.shape_cast %101 : vector<1x1x222xf32> to vector<1x222xf32>
    %c6_139 = arith.constant 6 : index
    %c256_140 = arith.constant 256 : index
    %103 = vector.load %arg4[%c6_139, %c256_140] : memref<27x512xf32, #tpu.memory_space<vmem>>, vector<1x222xf32>
    tpu.vector_store %arg4[%c6_139, %c256_140], %102 {strides = array<i32>} : memref<27x512xf32, #tpu.memory_space<vmem>>, vector<1x222xf32>,
    %c1_141 = arith.constant 1 : index
    %c0_142 = arith.constant 0 : index
    %c33_143 = arith.constant 33 : index
    %104 = vector.load %arg0[%c1_141, %c0_142, %c33_143] : memref<2x3x256xf32, #tpu.memory_space<vmem>>, vector<1x1x222xf32>
    %105 = vector.shape_cast %104 : vector<1x1x222xf32> to vector<1x222xf32>
    %c7_144 = arith.constant 7 : index
    %c256_145 = arith.constant 256 : index
    %106 = vector.load %arg4[%c7_144, %c256_145] : memref<27x512xf32, #tpu.memory_space<vmem>>, vector<1x222xf32>
    tpu.vector_store %arg4[%c7_144, %c256_145], %105 {strides = array<i32>} : memref<27x512xf32, #tpu.memory_space<vmem>>, vector<1x222xf32>,
    %c1_146 = arith.constant 1 : index
    %c0_147 = arith.constant 0 : index
    %c34_148 = arith.constant 34 : index
    %107 = vector.load %arg0[%c1_146, %c0_147, %c34_148] : memref<2x3x256xf32, #tpu.memory_space<vmem>>, vector<1x1x222xf32>
    %108 = vector.shape_cast %107 : vector<1x1x222xf32> to vector<1x222xf32>
    %c8_149 = arith.constant 8 : index
    %c256_150 = arith.constant 256 : index
    %109 = vector.load %arg4[%c8_149, %c256_150] : memref<27x512xf32, #tpu.memory_space<vmem>>, vector<1x222xf32>
    tpu.vector_store %arg4[%c8_149, %c256_150], %108 {strides = array<i32>} : memref<27x512xf32, #tpu.memory_space<vmem>>, vector<1x222xf32>,
    %c1_151 = arith.constant 1 : index
    %c1_152 = arith.constant 1 : index
    %c0_153 = arith.constant 0 : index
    %110 = vector.load %arg0[%c1_151, %c1_152, %c0_153] : memref<2x3x256xf32, #tpu.memory_space<vmem>>, vector<1x1x222xf32>
    %111 = vector.shape_cast %110 : vector<1x1x222xf32> to vector<1x222xf32>
    %c9_154 = arith.constant 9 : index
    %c256_155 = arith.constant 256 : index
    %112 = vector.load %arg4[%c9_154, %c256_155] : memref<27x512xf32, #tpu.memory_space<vmem>>, vector<1x222xf32>
    tpu.vector_store %arg4[%c9_154, %c256_155], %111 {strides = array<i32>} : memref<27x512xf32, #tpu.memory_space<vmem>>, vector<1x222xf32>,
    %c1_156 = arith.constant 1 : index
    %c1_157 = arith.constant 1 : index
    %c1_158 = arith.constant 1 : index
    %113 = vector.load %arg0[%c1_156, %c1_157, %c1_158] : memref<2x3x256xf32, #tpu.memory_space<vmem>>, vector<1x1x222xf32>
    %114 = vector.shape_cast %113 : vector<1x1x222xf32> to vector<1x222xf32>
    %c10_159 = arith.constant 10 : index
    %c256_160 = arith.constant 256 : index
    %115 = vector.load %arg4[%c10_159, %c256_160] : memref<27x512xf32, #tpu.memory_space<vmem>>, vector<1x222xf32>
    tpu.vector_store %arg4[%c10_159, %c256_160], %114 {strides = array<i32>} : memref<27x512xf32, #tpu.memory_space<vmem>>, vector<1x222xf32>,
    %c1_161 = arith.constant 1 : index
    %c1_162 = arith.constant 1 : index
    %c2_163 = arith.constant 2 : index
    %116 = vector.load %arg0[%c1_161, %c1_162, %c2_163] : memref<2x3x256xf32, #tpu.memory_space<vmem>>, vector<1x1x222xf32>
    %117 = vector.shape_cast %116 : vector<1x1x222xf32> to vector<1x222xf32>
    %c11_164 = arith.constant 11 : index
    %c256_165 = arith.constant 256 : index
    %118 = vector.load %arg4[%c11_164, %c256_165] : memref<27x512xf32, #tpu.memory_space<vmem>>, vector<1x222xf32>
    tpu.vector_store %arg4[%c11_164, %c256_165], %117 {strides = array<i32>} : memref<27x512xf32, #tpu.memory_space<vmem>>, vector<1x222xf32>,
    %c1_166 = arith.constant 1 : index
    %c1_167 = arith.constant 1 : index
    %c16_168 = arith.constant 16 : index
    %119 = vector.load %arg0[%c1_166, %c1_167, %c16_168] : memref<2x3x256xf32, #tpu.memory_space<vmem>>, vector<1x1x222xf32>
    %120 = vector.shape_cast %119 : vector<1x1x222xf32> to vector<1x222xf32>
    %c12_169 = arith.constant 12 : index
    %c256_170 = arith.constant 256 : index
    %121 = vector.load %arg4[%c12_169, %c256_170] : memref<27x512xf32, #tpu.memory_space<vmem>>, vector<1x222xf32>
    tpu.vector_store %arg4[%c12_169, %c256_170], %120 {strides = array<i32>} : memref<27x512xf32, #tpu.memory_space<vmem>>, vector<1x222xf32>,
    %c1_171 = arith.constant 1 : index
    %c1_172 = arith.constant 1 : index
    %c17_173 = arith.constant 17 : index
    %122 = vector.load %arg0[%c1_171, %c1_172, %c17_173] : memref<2x3x256xf32, #tpu.memory_space<vmem>>, vector<1x1x222xf32>
    %123 = vector.shape_cast %122 : vector<1x1x222xf32> to vector<1x222xf32>
    %c13_174 = arith.constant 13 : index
    %c256_175 = arith.constant 256 : index
    %124 = vector.load %arg4[%c13_174, %c256_175] : memref<27x512xf32, #tpu.memory_space<vmem>>, vector<1x222xf32>
    tpu.vector_store %arg4[%c13_174, %c256_175], %123 {strides = array<i32>} : memref<27x512xf32, #tpu.memory_space<vmem>>, vector<1x222xf32>,
    %c1_176 = arith.constant 1 : index
    %c1_177 = arith.constant 1 : index
    %c18_178 = arith.constant 18 : index
    %125 = vector.load %arg0[%c1_176, %c1_177, %c18_178] : memref<2x3x256xf32, #tpu.memory_space<vmem>>, vector<1x1x222xf32>
    %126 = vector.shape_cast %125 : vector<1x1x222xf32> to vector<1x222xf32>
    %c14_179 = arith.constant 14 : index
    %c256_180 = arith.constant 256 : index
    %127 = vector.load %arg4[%c14_179, %c256_180] : memref<27x512xf32, #tpu.memory_space<vmem>>, vector<1x222xf32>
    tpu.vector_store %arg4[%c14_179, %c256_180], %126 {strides = array<i32>} : memref<27x512xf32, #tpu.memory_space<vmem>>, vector<1x222xf32>,
    %c1_181 = arith.constant 1 : index
    %c1_182 = arith.constant 1 : index
    %c32_183 = arith.constant 32 : index
    %128 = vector.load %arg0[%c1_181, %c1_182, %c32_183] : memref<2x3x256xf32, #tpu.memory_space<vmem>>, vector<1x1x222xf32>
    %129 = vector.shape_cast %128 : vector<1x1x222xf32> to vector<1x222xf32>
    %c15_184 = arith.constant 15 : index
    %c256_185 = arith.constant 256 : index
    %130 = vector.load %arg4[%c15_184, %c256_185] : memref<27x512xf32, #tpu.memory_space<vmem>>, vector<1x222xf32>
    tpu.vector_store %arg4[%c15_184, %c256_185], %129 {strides = array<i32>} : memref<27x512xf32, #tpu.memory_space<vmem>>, vector<1x222xf32>,
    %c1_186 = arith.constant 1 : index
    %c1_187 = arith.constant 1 : index
    %c33_188 = arith.constant 33 : index
    %131 = vector.load %arg0[%c1_186, %c1_187, %c33_188] : memref<2x3x256xf32, #tpu.memory_space<vmem>>, vector<1x1x222xf32>
    %132 = vector.shape_cast %131 : vector<1x1x222xf32> to vector<1x222xf32>
    %c16_189 = arith.constant 16 : index
    %c256_190 = arith.constant 256 : index
    %133 = vector.load %arg4[%c16_189, %c256_190] : memref<27x512xf32, #tpu.memory_space<vmem>>, vector<1x222xf32>
    tpu.vector_store %arg4[%c16_189, %c256_190], %132 {strides = array<i32>} : memref<27x512xf32, #tpu.memory_space<vmem>>, vector<1x222xf32>,
    %c1_191 = arith.constant 1 : index
    %c1_192 = arith.constant 1 : index
    %c34_193 = arith.constant 34 : index
    %134 = vector.load %arg0[%c1_191, %c1_192, %c34_193] : memref<2x3x256xf32, #tpu.memory_space<vmem>>, vector<1x1x222xf32>
    %135 = vector.shape_cast %134 : vector<1x1x222xf32> to vector<1x222xf32>
    %c17_194 = arith.constant 17 : index
    %c256_195 = arith.constant 256 : index
    %136 = vector.load %arg4[%c17_194, %c256_195] : memref<27x512xf32, #tpu.memory_space<vmem>>, vector<1x222xf32>
    tpu.vector_store %arg4[%c17_194, %c256_195], %135 {strides = array<i32>} : memref<27x512xf32, #tpu.memory_space<vmem>>, vector<1x222xf32>,
    %c1_196 = arith.constant 1 : index
    %c2_197 = arith.constant 2 : index
    %c0_198 = arith.constant 0 : index
    %137 = vector.load %arg0[%c1_196, %c2_197, %c0_198] : memref<2x3x256xf32, #tpu.memory_space<vmem>>, vector<1x1x222xf32>
    %138 = vector.shape_cast %137 : vector<1x1x222xf32> to vector<1x222xf32>
    %c18_199 = arith.constant 18 : index
    %c256_200 = arith.constant 256 : index
    %139 = vector.load %arg4[%c18_199, %c256_200] : memref<27x512xf32, #tpu.memory_space<vmem>>, vector<1x222xf32>
    tpu.vector_store %arg4[%c18_199, %c256_200], %138 {strides = array<i32>} : memref<27x512xf32, #tpu.memory_space<vmem>>, vector<1x222xf32>,
    %c1_201 = arith.constant 1 : index
    %c2_202 = arith.constant 2 : index
    %c1_203 = arith.constant 1 : index
    %140 = vector.load %arg0[%c1_201, %c2_202, %c1_203] : memref<2x3x256xf32, #tpu.memory_space<vmem>>, vector<1x1x222xf32>
    %141 = vector.shape_cast %140 : vector<1x1x222xf32> to vector<1x222xf32>
    %c19_204 = arith.constant 19 : index
    %c256_205 = arith.constant 256 : index
    %142 = vector.load %arg4[%c19_204, %c256_205] : memref<27x512xf32, #tpu.memory_space<vmem>>, vector<1x222xf32>
    tpu.vector_store %arg4[%c19_204, %c256_205], %141 {strides = array<i32>} : memref<27x512xf32, #tpu.memory_space<vmem>>, vector<1x222xf32>,
    %c1_206 = arith.constant 1 : index
    %c2_207 = arith.constant 2 : index
    %c2_208 = arith.constant 2 : index
    %143 = vector.load %arg0[%c1_206, %c2_207, %c2_208] : memref<2x3x256xf32, #tpu.memory_space<vmem>>, vector<1x1x222xf32>
    %144 = vector.shape_cast %143 : vector<1x1x222xf32> to vector<1x222xf32>
    %c20_209 = arith.constant 20 : index
    %c256_210 = arith.constant 256 : index
    %145 = vector.load %arg4[%c20_209, %c256_210] : memref<27x512xf32, #tpu.memory_space<vmem>>, vector<1x222xf32>
    tpu.vector_store %arg4[%c20_209, %c256_210], %144 {strides = array<i32>} : memref<27x512xf32, #tpu.memory_space<vmem>>, vector<1x222xf32>,
    %c1_211 = arith.constant 1 : index
    %c2_212 = arith.constant 2 : index
    %c16_213 = arith.constant 16 : index
    %146 = vector.load %arg0[%c1_211, %c2_212, %c16_213] : memref<2x3x256xf32, #tpu.memory_space<vmem>>, vector<1x1x222xf32>
    %147 = vector.shape_cast %146 : vector<1x1x222xf32> to vector<1x222xf32>
    %c21_214 = arith.constant 21 : index
    %c256_215 = arith.constant 256 : index
    %148 = vector.load %arg4[%c21_214, %c256_215] : memref<27x512xf32, #tpu.memory_space<vmem>>, vector<1x222xf32>
    tpu.vector_store %arg4[%c21_214, %c256_215], %147 {strides = array<i32>} : memref<27x512xf32, #tpu.memory_space<vmem>>, vector<1x222xf32>,
    %c1_216 = arith.constant 1 : index
    %c2_217 = arith.constant 2 : index
    %c17_218 = arith.constant 17 : index
    %149 = vector.load %arg0[%c1_216, %c2_217, %c17_218] : memref<2x3x256xf32, #tpu.memory_space<vmem>>, vector<1x1x222xf32>
    %150 = vector.shape_cast %149 : vector<1x1x222xf32> to vector<1x222xf32>
    %c22_219 = arith.constant 22 : index
    %c256_220 = arith.constant 256 : index
    %151 = vector.load %arg4[%c22_219, %c256_220] : memref<27x512xf32, #tpu.memory_space<vmem>>, vector<1x222xf32>
    tpu.vector_store %arg4[%c22_219, %c256_220], %150 {strides = array<i32>} : memref<27x512xf32, #tpu.memory_space<vmem>>, vector<1x222xf32>,
    %c1_221 = arith.constant 1 : index
    %c2_222 = arith.constant 2 : index
    %c18_223 = arith.constant 18 : index
    %152 = vector.load %arg0[%c1_221, %c2_222, %c18_223] : memref<2x3x256xf32, #tpu.memory_space<vmem>>, vector<1x1x222xf32>
    %153 = vector.shape_cast %152 : vector<1x1x222xf32> to vector<1x222xf32>
    %c23_224 = arith.constant 23 : index
    %c256_225 = arith.constant 256 : index
    %154 = vector.load %arg4[%c23_224, %c256_225] : memref<27x512xf32, #tpu.memory_space<vmem>>, vector<1x222xf32>
    tpu.vector_store %arg4[%c23_224, %c256_225], %153 {strides = array<i32>} : memref<27x512xf32, #tpu.memory_space<vmem>>, vector<1x222xf32>,
    %c1_226 = arith.constant 1 : index
    %c2_227 = arith.constant 2 : index
    %c32_228 = arith.constant 32 : index
    %155 = vector.load %arg0[%c1_226, %c2_227, %c32_228] : memref<2x3x256xf32, #tpu.memory_space<vmem>>, vector<1x1x222xf32>
    %156 = vector.shape_cast %155 : vector<1x1x222xf32> to vector<1x222xf32>
    %c24_229 = arith.constant 24 : index
    %c256_230 = arith.constant 256 : index
    %157 = vector.load %arg4[%c24_229, %c256_230] : memref<27x512xf32, #tpu.memory_space<vmem>>, vector<1x222xf32>
    tpu.vector_store %arg4[%c24_229, %c256_230], %156 {strides = array<i32>} : memref<27x512xf32, #tpu.memory_space<vmem>>, vector<1x222xf32>,
    %c1_231 = arith.constant 1 : index
    %c2_232 = arith.constant 2 : index
    %c33_233 = arith.constant 33 : index
    %158 = vector.load %arg0[%c1_231, %c2_232, %c33_233] : memref<2x3x256xf32, #tpu.memory_space<vmem>>, vector<1x1x222xf32>
    %159 = vector.shape_cast %158 : vector<1x1x222xf32> to vector<1x222xf32>
    %c25_234 = arith.constant 25 : index
    %c256_235 = arith.constant 256 : index
    %160 = vector.load %arg4[%c25_234, %c256_235] : memref<27x512xf32, #tpu.memory_space<vmem>>, vector<1x222xf32>
    tpu.vector_store %arg4[%c25_234, %c256_235], %159 {strides = array<i32>} : memref<27x512xf32, #tpu.memory_space<vmem>>, vector<1x222xf32>,
    %c1_236 = arith.constant 1 : index
    %c2_237 = arith.constant 2 : index
    %c34_238 = arith.constant 34 : index
    %161 = vector.load %arg0[%c1_236, %c2_237, %c34_238] : memref<2x3x256xf32, #tpu.memory_space<vmem>>, vector<1x1x222xf32>
    %162 = vector.shape_cast %161 : vector<1x1x222xf32> to vector<1x222xf32>
    %c26_239 = arith.constant 26 : index
    %c256_240 = arith.constant 256 : index
    %163 = vector.load %arg4[%c26_239, %c256_240] : memref<27x512xf32, #tpu.memory_space<vmem>>, vector<1x222xf32>
    tpu.vector_store %arg4[%c26_239, %c256_240], %162 {strides = array<i32>} : memref<27x512xf32, #tpu.memory_space<vmem>>, vector<1x222xf32>,
    %c0_241 = arith.constant 0 : index
    %c0_242 = arith.constant 0 : index
    %164 = vector.load %arg1[%c0_241, %c0_242] : memref<6x27xf32, #tpu.memory_space<vmem>>, vector<6x27xf32>
    %c0_243 = arith.constant 0 : index
    %c0_244 = arith.constant 0 : index
    %165 = vector.load %arg4[%c0_243, %c0_244] : memref<27x512xf32, #tpu.memory_space<vmem>>, vector<27x512xf32>
    %cst_245 = arith.constant dense<0.000000e+00> : vector<6x512xf32>
    %166 = tpu.matmul %164, %165, %cst_245 {dimension_numbers = #tpu.dot_dimension_numbers<[1], [0], [0], [1], [0, 0, 1, 1], [], []>} : vector<6x27xf32>, vector<27x512xf32>, vector<6x512xf32> -> vector<6x512xf32>
    %c0_246 = arith.constant 0 : index
    %c0_247 = arith.constant 0 : index
    %167 = vector.load %arg2[%c0_246, %c0_247] : memref<6x1xf32, #tpu.memory_space<vmem>>, vector<6x1xf32>
    %168 = vector.broadcast %167 : vector<6x1xf32> to vector<6x512xf32>
    %169 = arith.addf %166, %168 : vector<6x512xf32>
    %c0_248 = arith.constant 0 : index
    %c0_249 = arith.constant 0 : index
    %170 = vector.load %arg5[%c0_248, %c0_249] : memref<6x512xf32, #tpu.memory_space<vmem>>, vector<6x512xf32>
    tpu.vector_store %arg5[%c0_248, %c0_249], %169 {strides = array<i32>} : memref<6x512xf32, #tpu.memory_space<vmem>>, vector<6x512xf32>,
    %c0_250 = arith.constant 0 : index
    %c0_251 = arith.constant 0 : index
    %171 = vector.load %arg5[%c0_250, %c0_251] : memref<6x512xf32, #tpu.memory_space<vmem>>, vector<6x14xf32>
    %c0_252 = arith.constant 0 : index
    %c0_253 = arith.constant 0 : index
    %c0_254 = arith.constant 0 : index
    %172 = vector.load %arg3[%c0_252, %c0_253, %c0_254] : memref<2x6x196xf32, #tpu.memory_space<vmem>>, vector<1x6x14xf32>
    %173 = vector.shape_cast %172 : vector<1x6x14xf32> to vector<6x14xf32>
    %174 = vector.shape_cast %171 : vector<6x14xf32> to vector<1x6x14xf32>
    tpu.vector_store %arg3[%c0_252, %c0_253, %c0_254], %174 {strides = array<i32>} : memref<2x6x196xf32, #tpu.memory_space<vmem>>, vector<1x6x14xf32>,
    %c0_255 = arith.constant 0 : index
    %c16_256 = arith.constant 16 : index
    %175 = vector.load %arg5[%c0_255, %c16_256] : memref<6x512xf32, #tpu.memory_space<vmem>>, vector<6x14xf32>
    %c0_257 = arith.constant 0 : index
    %c0_258 = arith.constant 0 : index
    %c14_259 = arith.constant 14 : index
    %176 = vector.load %arg3[%c0_257, %c0_258, %c14_259] : memref<2x6x196xf32, #tpu.memory_space<vmem>>, vector<1x6x14xf32>
    %177 = vector.shape_cast %176 : vector<1x6x14xf32> to vector<6x14xf32>
    %178 = vector.shape_cast %175 : vector<6x14xf32> to vector<1x6x14xf32>
    tpu.vector_store %arg3[%c0_257, %c0_258, %c14_259], %178 {strides = array<i32>} : memref<2x6x196xf32, #tpu.memory_space<vmem>>, vector<1x6x14xf32>,
    %c0_260 = arith.constant 0 : index
    %c32_261 = arith.constant 32 : index
    %179 = vector.load %arg5[%c0_260, %c32_261] : memref<6x512xf32, #tpu.memory_space<vmem>>, vector<6x14xf32>
    %c0_262 = arith.constant 0 : index
    %c0_263 = arith.constant 0 : index
    %c28 = arith.constant 28 : index
    %180 = vector.load %arg3[%c0_262, %c0_263, %c28] : memref<2x6x196xf32, #tpu.memory_space<vmem>>, vector<1x6x14xf32>
    %181 = vector.shape_cast %180 : vector<1x6x14xf32> to vector<6x14xf32>
    %182 = vector.shape_cast %179 : vector<6x14xf32> to vector<1x6x14xf32>
    tpu.vector_store %arg3[%c0_262, %c0_263, %c28], %182 {strides = array<i32>} : memref<2x6x196xf32, #tpu.memory_space<vmem>>, vector<1x6x14xf32>,
    %c0_264 = arith.constant 0 : index
    %c48 = arith.constant 48 : index
    %183 = vector.load %arg5[%c0_264, %c48] : memref<6x512xf32, #tpu.memory_space<vmem>>, vector<6x14xf32>
    %c0_265 = arith.constant 0 : index
    %c0_266 = arith.constant 0 : index
    %c42 = arith.constant 42 : index
    %184 = vector.load %arg3[%c0_265, %c0_266, %c42] : memref<2x6x196xf32, #tpu.memory_space<vmem>>, vector<1x6x14xf32>
    %185 = vector.shape_cast %184 : vector<1x6x14xf32> to vector<6x14xf32>
    %186 = vector.shape_cast %183 : vector<6x14xf32> to vector<1x6x14xf32>
    tpu.vector_store %arg3[%c0_265, %c0_266, %c42], %186 {strides = array<i32>} : memref<2x6x196xf32, #tpu.memory_space<vmem>>, vector<1x6x14xf32>,
    %c0_267 = arith.constant 0 : index
    %c64 = arith.constant 64 : index
    %187 = vector.load %arg5[%c0_267, %c64] : memref<6x512xf32, #tpu.memory_space<vmem>>, vector<6x14xf32>
    %c0_268 = arith.constant 0 : index
    %c0_269 = arith.constant 0 : index
    %c56 = arith.constant 56 : index
    %188 = vector.load %arg3[%c0_268, %c0_269, %c56] : memref<2x6x196xf32, #tpu.memory_space<vmem>>, vector<1x6x14xf32>
    %189 = vector.shape_cast %188 : vector<1x6x14xf32> to vector<6x14xf32>
    %190 = vector.shape_cast %187 : vector<6x14xf32> to vector<1x6x14xf32>
    tpu.vector_store %arg3[%c0_268, %c0_269, %c56], %190 {strides = array<i32>} : memref<2x6x196xf32, #tpu.memory_space<vmem>>, vector<1x6x14xf32>,
    %c0_270 = arith.constant 0 : index
    %c80 = arith.constant 80 : index
    %191 = vector.load %arg5[%c0_270, %c80] : memref<6x512xf32, #tpu.memory_space<vmem>>, vector<6x14xf32>
    %c0_271 = arith.constant 0 : index
    %c0_272 = arith.constant 0 : index
    %c70 = arith.constant 70 : index
    %192 = vector.load %arg3[%c0_271, %c0_272, %c70] : memref<2x6x196xf32, #tpu.memory_space<vmem>>, vector<1x6x14xf32>
    %193 = vector.shape_cast %192 : vector<1x6x14xf32> to vector<6x14xf32>
    %194 = vector.shape_cast %191 : vector<6x14xf32> to vector<1x6x14xf32>
    tpu.vector_store %arg3[%c0_271, %c0_272, %c70], %194 {strides = array<i32>} : memref<2x6x196xf32, #tpu.memory_space<vmem>>, vector<1x6x14xf32>,
    %c0_273 = arith.constant 0 : index
    %c96 = arith.constant 96 : index
    %195 = vector.load %arg5[%c0_273, %c96] : memref<6x512xf32, #tpu.memory_space<vmem>>, vector<6x14xf32>
    %c0_274 = arith.constant 0 : index
    %c0_275 = arith.constant 0 : index
    %c84 = arith.constant 84 : index
    %196 = vector.load %arg3[%c0_274, %c0_275, %c84] : memref<2x6x196xf32, #tpu.memory_space<vmem>>, vector<1x6x14xf32>
    %197 = vector.shape_cast %196 : vector<1x6x14xf32> to vector<6x14xf32>
    %198 = vector.shape_cast %195 : vector<6x14xf32> to vector<1x6x14xf32>
    tpu.vector_store %arg3[%c0_274, %c0_275, %c84], %198 {strides = array<i32>} : memref<2x6x196xf32, #tpu.memory_space<vmem>>, vector<1x6x14xf32>,
    %c0_276 = arith.constant 0 : index
    %c112 = arith.constant 112 : index
    %199 = vector.load %arg5[%c0_276, %c112] : memref<6x512xf32, #tpu.memory_space<vmem>>, vector<6x14xf32>
    %c0_277 = arith.constant 0 : index
    %c0_278 = arith.constant 0 : index
    %c98 = arith.constant 98 : index
    %200 = vector.load %arg3[%c0_277, %c0_278, %c98] : memref<2x6x196xf32, #tpu.memory_space<vmem>>, vector<1x6x14xf32>
    %201 = vector.shape_cast %200 : vector<1x6x14xf32> to vector<6x14xf32>
    %202 = vector.shape_cast %199 : vector<6x14xf32> to vector<1x6x14xf32>
    tpu.vector_store %arg3[%c0_277, %c0_278, %c98], %202 {strides = array<i32>} : memref<2x6x196xf32, #tpu.memory_space<vmem>>, vector<1x6x14xf32>,
    %c0_279 = arith.constant 0 : index
    %c128 = arith.constant 128 : index
    %203 = vector.load %arg5[%c0_279, %c128] : memref<6x512xf32, #tpu.memory_space<vmem>>, vector<6x14xf32>
    %c0_280 = arith.constant 0 : index
    %c0_281 = arith.constant 0 : index
    %c112_282 = arith.constant 112 : index
    %204 = vector.load %arg3[%c0_280, %c0_281, %c112_282] : memref<2x6x196xf32, #tpu.memory_space<vmem>>, vector<1x6x14xf32>
    %205 = vector.shape_cast %204 : vector<1x6x14xf32> to vector<6x14xf32>
    %206 = vector.shape_cast %203 : vector<6x14xf32> to vector<1x6x14xf32>
    tpu.vector_store %arg3[%c0_280, %c0_281, %c112_282], %206 {strides = array<i32>} : memref<2x6x196xf32, #tpu.memory_space<vmem>>, vector<1x6x14xf32>,
    %c0_283 = arith.constant 0 : index
    %c144 = arith.constant 144 : index
    %207 = vector.load %arg5[%c0_283, %c144] : memref<6x512xf32, #tpu.memory_space<vmem>>, vector<6x14xf32>
    %c0_284 = arith.constant 0 : index
    %c0_285 = arith.constant 0 : index
    %c126 = arith.constant 126 : index
    %208 = vector.load %arg3[%c0_284, %c0_285, %c126] : memref<2x6x196xf32, #tpu.memory_space<vmem>>, vector<1x6x14xf32>
    %209 = vector.shape_cast %208 : vector<1x6x14xf32> to vector<6x14xf32>
    %210 = vector.shape_cast %207 : vector<6x14xf32> to vector<1x6x14xf32>
    tpu.vector_store %arg3[%c0_284, %c0_285, %c126], %210 {strides = array<i32>} : memref<2x6x196xf32, #tpu.memory_space<vmem>>, vector<1x6x14xf32>,
    %c0_286 = arith.constant 0 : index
    %c160 = arith.constant 160 : index
    %211 = vector.load %arg5[%c0_286, %c160] : memref<6x512xf32, #tpu.memory_space<vmem>>, vector<6x14xf32>
    %c0_287 = arith.constant 0 : index
    %c0_288 = arith.constant 0 : index
    %c140 = arith.constant 140 : index
    %212 = vector.load %arg3[%c0_287, %c0_288, %c140] : memref<2x6x196xf32, #tpu.memory_space<vmem>>, vector<1x6x14xf32>
    %213 = vector.shape_cast %212 : vector<1x6x14xf32> to vector<6x14xf32>
    %214 = vector.shape_cast %211 : vector<6x14xf32> to vector<1x6x14xf32>
    tpu.vector_store %arg3[%c0_287, %c0_288, %c140], %214 {strides = array<i32>} : memref<2x6x196xf32, #tpu.memory_space<vmem>>, vector<1x6x14xf32>,
    %c0_289 = arith.constant 0 : index
    %c176 = arith.constant 176 : index
    %215 = vector.load %arg5[%c0_289, %c176] : memref<6x512xf32, #tpu.memory_space<vmem>>, vector<6x14xf32>
    %c0_290 = arith.constant 0 : index
    %c0_291 = arith.constant 0 : index
    %c154 = arith.constant 154 : index
    %216 = vector.load %arg3[%c0_290, %c0_291, %c154] : memref<2x6x196xf32, #tpu.memory_space<vmem>>, vector<1x6x14xf32>
    %217 = vector.shape_cast %216 : vector<1x6x14xf32> to vector<6x14xf32>
    %218 = vector.shape_cast %215 : vector<6x14xf32> to vector<1x6x14xf32>
    tpu.vector_store %arg3[%c0_290, %c0_291, %c154], %218 {strides = array<i32>} : memref<2x6x196xf32, #tpu.memory_space<vmem>>, vector<1x6x14xf32>,
    %c0_292 = arith.constant 0 : index
    %c192 = arith.constant 192 : index
    %219 = vector.load %arg5[%c0_292, %c192] : memref<6x512xf32, #tpu.memory_space<vmem>>, vector<6x14xf32>
    %c0_293 = arith.constant 0 : index
    %c0_294 = arith.constant 0 : index
    %c168 = arith.constant 168 : index
    %220 = vector.load %arg3[%c0_293, %c0_294, %c168] : memref<2x6x196xf32, #tpu.memory_space<vmem>>, vector<1x6x14xf32>
    %221 = vector.shape_cast %220 : vector<1x6x14xf32> to vector<6x14xf32>
    %222 = vector.shape_cast %219 : vector<6x14xf32> to vector<1x6x14xf32>
    tpu.vector_store %arg3[%c0_293, %c0_294, %c168], %222 {strides = array<i32>} : memref<2x6x196xf32, #tpu.memory_space<vmem>>, vector<1x6x14xf32>,
    %c0_295 = arith.constant 0 : index
    %c208 = arith.constant 208 : index
    %223 = vector.load %arg5[%c0_295, %c208] : memref<6x512xf32, #tpu.memory_space<vmem>>, vector<6x14xf32>
    %c0_296 = arith.constant 0 : index
    %c0_297 = arith.constant 0 : index
    %c182 = arith.constant 182 : index
    %224 = vector.load %arg3[%c0_296, %c0_297, %c182] : memref<2x6x196xf32, #tpu.memory_space<vmem>>, vector<1x6x14xf32>
    %225 = vector.shape_cast %224 : vector<1x6x14xf32> to vector<6x14xf32>
    %226 = vector.shape_cast %223 : vector<6x14xf32> to vector<1x6x14xf32>
    tpu.vector_store %arg3[%c0_296, %c0_297, %c182], %226 {strides = array<i32>} : memref<2x6x196xf32, #tpu.memory_space<vmem>>, vector<1x6x14xf32>,
    %c0_298 = arith.constant 0 : index
    %c256_299 = arith.constant 256 : index
    %227 = vector.load %arg5[%c0_298, %c256_299] : memref<6x512xf32, #tpu.memory_space<vmem>>, vector<6x14xf32>
    %c1_300 = arith.constant 1 : index
    %c0_301 = arith.constant 0 : index
    %c0_302 = arith.constant 0 : index
    %228 = vector.load %arg3[%c1_300, %c0_301, %c0_302] : memref<2x6x196xf32, #tpu.memory_space<vmem>>, vector<1x6x14xf32>
    %229 = vector.shape_cast %228 : vector<1x6x14xf32> to vector<6x14xf32>
    %230 = vector.shape_cast %227 : vector<6x14xf32> to vector<1x6x14xf32>
    tpu.vector_store %arg3[%c1_300, %c0_301, %c0_302], %230 {strides = array<i32>} : memref<2x6x196xf32, #tpu.memory_space<vmem>>, vector<1x6x14xf32>,
    %c0_303 = arith.constant 0 : index
    %c272 = arith.constant 272 : index
    %231 = vector.load %arg5[%c0_303, %c272] : memref<6x512xf32, #tpu.memory_space<vmem>>, vector<6x14xf32>
    %c1_304 = arith.constant 1 : index
    %c0_305 = arith.constant 0 : index
    %c14_306 = arith.constant 14 : index
    %232 = vector.load %arg3[%c1_304, %c0_305, %c14_306] : memref<2x6x196xf32, #tpu.memory_space<vmem>>, vector<1x6x14xf32>
    %233 = vector.shape_cast %232 : vector<1x6x14xf32> to vector<6x14xf32>
    %234 = vector.shape_cast %231 : vector<6x14xf32> to vector<1x6x14xf32>
    tpu.vector_store %arg3[%c1_304, %c0_305, %c14_306], %234 {strides = array<i32>} : memref<2x6x196xf32, #tpu.memory_space<vmem>>, vector<1x6x14xf32>,
    %c0_307 = arith.constant 0 : index
    %c288 = arith.constant 288 : index
    %235 = vector.load %arg5[%c0_307, %c288] : memref<6x512xf32, #tpu.memory_space<vmem>>, vector<6x14xf32>
    %c1_308 = arith.constant 1 : index
    %c0_309 = arith.constant 0 : index
    %c28_310 = arith.constant 28 : index
    %236 = vector.load %arg3[%c1_308, %c0_309, %c28_310] : memref<2x6x196xf32, #tpu.memory_space<vmem>>, vector<1x6x14xf32>
    %237 = vector.shape_cast %236 : vector<1x6x14xf32> to vector<6x14xf32>
    %238 = vector.shape_cast %235 : vector<6x14xf32> to vector<1x6x14xf32>
    tpu.vector_store %arg3[%c1_308, %c0_309, %c28_310], %238 {strides = array<i32>} : memref<2x6x196xf32, #tpu.memory_space<vmem>>, vector<1x6x14xf32>,
    %c0_311 = arith.constant 0 : index
    %c304 = arith.constant 304 : index
    %239 = vector.load %arg5[%c0_311, %c304] : memref<6x512xf32, #tpu.memory_space<vmem>>, vector<6x14xf32>
    %c1_312 = arith.constant 1 : index
    %c0_313 = arith.constant 0 : index
    %c42_314 = arith.constant 42 : index
    %240 = vector.load %arg3[%c1_312, %c0_313, %c42_314] : memref<2x6x196xf32, #tpu.memory_space<vmem>>, vector<1x6x14xf32>
    %241 = vector.shape_cast %240 : vector<1x6x14xf32> to vector<6x14xf32>
    %242 = vector.shape_cast %239 : vector<6x14xf32> to vector<1x6x14xf32>
    tpu.vector_store %arg3[%c1_312, %c0_313, %c42_314], %242 {strides = array<i32>} : memref<2x6x196xf32, #tpu.memory_space<vmem>>, vector<1x6x14xf32>,
    %c0_315 = arith.constant 0 : index
    %c320 = arith.constant 320 : index
    %243 = vector.load %arg5[%c0_315, %c320] : memref<6x512xf32, #tpu.memory_space<vmem>>, vector<6x14xf32>
    %c1_316 = arith.constant 1 : index
    %c0_317 = arith.constant 0 : index
    %c56_318 = arith.constant 56 : index
    %244 = vector.load %arg3[%c1_316, %c0_317, %c56_318] : memref<2x6x196xf32, #tpu.memory_space<vmem>>, vector<1x6x14xf32>
    %245 = vector.shape_cast %244 : vector<1x6x14xf32> to vector<6x14xf32>
    %246 = vector.shape_cast %243 : vector<6x14xf32> to vector<1x6x14xf32>
    tpu.vector_store %arg3[%c1_316, %c0_317, %c56_318], %246 {strides = array<i32>} : memref<2x6x196xf32, #tpu.memory_space<vmem>>, vector<1x6x14xf32>,
    %c0_319 = arith.constant 0 : index
    %c336 = arith.constant 336 : index
    %247 = vector.load %arg5[%c0_319, %c336] : memref<6x512xf32, #tpu.memory_space<vmem>>, vector<6x14xf32>
    %c1_320 = arith.constant 1 : index
    %c0_321 = arith.constant 0 : index
    %c70_322 = arith.constant 70 : index
    %248 = vector.load %arg3[%c1_320, %c0_321, %c70_322] : memref<2x6x196xf32, #tpu.memory_space<vmem>>, vector<1x6x14xf32>
    %249 = vector.shape_cast %248 : vector<1x6x14xf32> to vector<6x14xf32>
    %250 = vector.shape_cast %247 : vector<6x14xf32> to vector<1x6x14xf32>
    tpu.vector_store %arg3[%c1_320, %c0_321, %c70_322], %250 {strides = array<i32>} : memref<2x6x196xf32, #tpu.memory_space<vmem>>, vector<1x6x14xf32>,
    %c0_323 = arith.constant 0 : index
    %c352 = arith.constant 352 : index
    %251 = vector.load %arg5[%c0_323, %c352] : memref<6x512xf32, #tpu.memory_space<vmem>>, vector<6x14xf32>
    %c1_324 = arith.constant 1 : index
    %c0_325 = arith.constant 0 : index
    %c84_326 = arith.constant 84 : index
    %252 = vector.load %arg3[%c1_324, %c0_325, %c84_326] : memref<2x6x196xf32, #tpu.memory_space<vmem>>, vector<1x6x14xf32>
    %253 = vector.shape_cast %252 : vector<1x6x14xf32> to vector<6x14xf32>
    %254 = vector.shape_cast %251 : vector<6x14xf32> to vector<1x6x14xf32>
    tpu.vector_store %arg3[%c1_324, %c0_325, %c84_326], %254 {strides = array<i32>} : memref<2x6x196xf32, #tpu.memory_space<vmem>>, vector<1x6x14xf32>,
    %c0_327 = arith.constant 0 : index
    %c368 = arith.constant 368 : index
    %255 = vector.load %arg5[%c0_327, %c368] : memref<6x512xf32, #tpu.memory_space<vmem>>, vector<6x14xf32>
    %c1_328 = arith.constant 1 : index
    %c0_329 = arith.constant 0 : index
    %c98_330 = arith.constant 98 : index
    %256 = vector.load %arg3[%c1_328, %c0_329, %c98_330] : memref<2x6x196xf32, #tpu.memory_space<vmem>>, vector<1x6x14xf32>
    %257 = vector.shape_cast %256 : vector<1x6x14xf32> to vector<6x14xf32>
    %258 = vector.shape_cast %255 : vector<6x14xf32> to vector<1x6x14xf32>
    tpu.vector_store %arg3[%c1_328, %c0_329, %c98_330], %258 {strides = array<i32>} : memref<2x6x196xf32, #tpu.memory_space<vmem>>, vector<1x6x14xf32>,
    %c0_331 = arith.constant 0 : index
    %c384 = arith.constant 384 : index
    %259 = vector.load %arg5[%c0_331, %c384] : memref<6x512xf32, #tpu.memory_space<vmem>>, vector<6x14xf32>
    %c1_332 = arith.constant 1 : index
    %c0_333 = arith.constant 0 : index
    %c112_334 = arith.constant 112 : index
    %260 = vector.load %arg3[%c1_332, %c0_333, %c112_334] : memref<2x6x196xf32, #tpu.memory_space<vmem>>, vector<1x6x14xf32>
    %261 = vector.shape_cast %260 : vector<1x6x14xf32> to vector<6x14xf32>
    %262 = vector.shape_cast %259 : vector<6x14xf32> to vector<1x6x14xf32>
    tpu.vector_store %arg3[%c1_332, %c0_333, %c112_334], %262 {strides = array<i32>} : memref<2x6x196xf32, #tpu.memory_space<vmem>>, vector<1x6x14xf32>,
    %c0_335 = arith.constant 0 : index
    %c400 = arith.constant 400 : index
    %263 = vector.load %arg5[%c0_335, %c400] : memref<6x512xf32, #tpu.memory_space<vmem>>, vector<6x14xf32>
    %c1_336 = arith.constant 1 : index
    %c0_337 = arith.constant 0 : index
    %c126_338 = arith.constant 126 : index
    %264 = vector.load %arg3[%c1_336, %c0_337, %c126_338] : memref<2x6x196xf32, #tpu.memory_space<vmem>>, vector<1x6x14xf32>
    %265 = vector.shape_cast %264 : vector<1x6x14xf32> to vector<6x14xf32>
    %266 = vector.shape_cast %263 : vector<6x14xf32> to vector<1x6x14xf32>
    tpu.vector_store %arg3[%c1_336, %c0_337, %c126_338], %266 {strides = array<i32>} : memref<2x6x196xf32, #tpu.memory_space<vmem>>, vector<1x6x14xf32>,
    %c0_339 = arith.constant 0 : index
    %c416 = arith.constant 416 : index
    %267 = vector.load %arg5[%c0_339, %c416] : memref<6x512xf32, #tpu.memory_space<vmem>>, vector<6x14xf32>
    %c1_340 = arith.constant 1 : index
    %c0_341 = arith.constant 0 : index
    %c140_342 = arith.constant 140 : index
    %268 = vector.load %arg3[%c1_340, %c0_341, %c140_342] : memref<2x6x196xf32, #tpu.memory_space<vmem>>, vector<1x6x14xf32>
    %269 = vector.shape_cast %268 : vector<1x6x14xf32> to vector<6x14xf32>
    %270 = vector.shape_cast %267 : vector<6x14xf32> to vector<1x6x14xf32>
    tpu.vector_store %arg3[%c1_340, %c0_341, %c140_342], %270 {strides = array<i32>} : memref<2x6x196xf32, #tpu.memory_space<vmem>>, vector<1x6x14xf32>,
    %c0_343 = arith.constant 0 : index
    %c432 = arith.constant 432 : index
    %271 = vector.load %arg5[%c0_343, %c432] : memref<6x512xf32, #tpu.memory_space<vmem>>, vector<6x14xf32>
    %c1_344 = arith.constant 1 : index
    %c0_345 = arith.constant 0 : index
    %c154_346 = arith.constant 154 : index
    %272 = vector.load %arg3[%c1_344, %c0_345, %c154_346] : memref<2x6x196xf32, #tpu.memory_space<vmem>>, vector<1x6x14xf32>
    %273 = vector.shape_cast %272 : vector<1x6x14xf32> to vector<6x14xf32>
    %274 = vector.shape_cast %271 : vector<6x14xf32> to vector<1x6x14xf32>
    tpu.vector_store %arg3[%c1_344, %c0_345, %c154_346], %274 {strides = array<i32>} : memref<2x6x196xf32, #tpu.memory_space<vmem>>, vector<1x6x14xf32>,
    %c0_347 = arith.constant 0 : index
    %c448 = arith.constant 448 : index
    %275 = vector.load %arg5[%c0_347, %c448] : memref<6x512xf32, #tpu.memory_space<vmem>>, vector<6x14xf32>
    %c1_348 = arith.constant 1 : index
    %c0_349 = arith.constant 0 : index
    %c168_350 = arith.constant 168 : index
    %276 = vector.load %arg3[%c1_348, %c0_349, %c168_350] : memref<2x6x196xf32, #tpu.memory_space<vmem>>, vector<1x6x14xf32>
    %277 = vector.shape_cast %276 : vector<1x6x14xf32> to vector<6x14xf32>
    %278 = vector.shape_cast %275 : vector<6x14xf32> to vector<1x6x14xf32>
    tpu.vector_store %arg3[%c1_348, %c0_349, %c168_350], %278 {strides = array<i32>} : memref<2x6x196xf32, #tpu.memory_space<vmem>>, vector<1x6x14xf32>,
    %c0_351 = arith.constant 0 : index
    %c464 = arith.constant 464 : index
    %279 = vector.load %arg5[%c0_351, %c464] : memref<6x512xf32, #tpu.memory_space<vmem>>, vector<6x14xf32>
    %c1_352 = arith.constant 1 : index
    %c0_353 = arith.constant 0 : index
    %c182_354 = arith.constant 182 : index
    %280 = vector.load %arg3[%c1_352, %c0_353, %c182_354] : memref<2x6x196xf32, #tpu.memory_space<vmem>>, vector<1x6x14xf32>
    %281 = vector.shape_cast %280 : vector<1x6x14xf32> to vector<6x14xf32>
    %282 = vector.shape_cast %279 : vector<6x14xf32> to vector<1x6x14xf32>
    tpu.vector_store %arg3[%c1_352, %c0_353, %c182_354], %282 {strides = array<i32>} : memref<2x6x196xf32, #tpu.memory_space<vmem>>, vector<1x6x14xf32>,
    return
  }
}

</mosaic_0001>

<llo_original>
// kernel: conv2d_pallas.1
$region0: #{conv2d_pallas.1}
  #allocation0 [shape = 'u32[]', space=smem, size = 0x4, offset = 0x4, fixed_abs, tag = 'smem constant byte address 0x4 - core index']
  #allocation1 [shape = 'u32[144,128]{1,0:T(1,128)}', space=vmem, size = 0x12000, scoped, tag = 'internal scratch']
  #allocation2 [shape = 'f32[27,512]{1,0:T(8,128)}', space=vmem, size = 0x10000, scoped, tag = 'scratch operand']
  #allocation3 [shape = 'f32[6,512]{1,0:T(8,128)}', space=vmem, size = 0x4000, scoped, tag = 'scratch operand']
  %s0 = inlined_call_operand.vmem [shape: f32[2,3,256], index: 0, kind: input, shape index: {}]
  %s1 = inlined_call_operand.vmem [shape: f32[6,27], index: 1, kind: input, shape index: {}]
  %s2 = inlined_call_operand.vmem [shape: f32[6,1], index: 2, kind: input, shape index: {}]
  %s3 = inlined_call_operand.vmem [shape: f32[2,6,196], index: 3, kind: output, shape index: {}]
  %s4 = sld [smem:[#allocation0]]
  $region22: #{conv2d_pallas.1} parent=0
    _
  %s6 = ssub.s32 1, %s4
  %s7 = scalar_select 0, %s6, %s4
  // Predicated region
  $region2: #{conv2d_pallas.1} parent=0 // pred_check
    _
  $region3: #{conv2d_pallas.1} parent=0 // pred_check_branch
    %9 = sbr.rel (0) target = $region5
  $region4: #{conv2d_pallas.1} parent=0 // pred_region
    _
  $region5: #{conv2d_pallas.1} parent=0 // pred_fallthru
    _
  // Predicated region
  $region6: #{conv2d_pallas.1} parent=0 // pred_check
    _
  $region7: #{conv2d_pallas.1} parent=0 // pred_check_branch
    %11 = sbr.rel (0) target = $region9
  $region8: #{conv2d_pallas.1} parent=0 // pred_region
    _
  $region9: #{conv2d_pallas.1} parent=0 // pred_fallthru
    _
  // Predicated region
  $region10: #{conv2d_pallas.1} parent=0 // pred_check
    _
  $region11: #{conv2d_pallas.1} parent=0 // pred_check_branch
    %13 = sbr.rel (0) target = $region13
  $region12: #{conv2d_pallas.1} parent=0 // pred_region
    _
  $region13: #{conv2d_pallas.1} parent=0 // pred_fallthru
    _
  %14 = vst [vmem:[#allocation2] sm:$0xff] 0.0
  %15 = vst [vmem:[#allocation2 + $0x8] sm:$0xff] 0.0
  %16 = vst [vmem:[#allocation2 + $0x10] sm:$0xff] 0.0
  %17 = vst [vmem:[#allocation2 + $0x18] sm:$0xff] 0.0
  %18 = vst [vmem:[#allocation2 + $0x20] sm:$0xff] 0.0
  %19 = vst [vmem:[#allocation2 + $0x28] sm:$0xff] 0.0
  %20 = vst [vmem:[#allocation2 + $0x30] sm:$0xff] 0.0
  %21 = vst [vmem:[#allocation2 + $0x38] sm:$0xff] 0.0
  %22 = vst [vmem:[#allocation2 + $0x40] sm:$0xff] 0.0
  %23 = vst [vmem:[#allocation2 + $0x48] sm:$0xff] 0.0
  %24 = vst [vmem:[#allocation2 + $0x50] sm:$0xff] 0.0
  %25 = vst [vmem:[#allocation2 + $0x58] sm:$0xff] 0.0
  %26 = vst [vmem:[#allocation2 + $0x60] sm:$0x7] 0.0
  %27 = vst [vmem:[#allocation2 + $0x68] sm:$0x7] 0.0
  %28 = vst [vmem:[#allocation2 + $0x70] sm:$0x7] 0.0
  %29 = vst [vmem:[#allocation2 + $0x78] sm:$0x7] 0.0
  %v30 = vld [vmem:[%s0] ss:$4 sm:$0x3]
  %v31 = vlaneseq
  %vm32 = vcmp.ge.s32.totalorder %v31, 0
  %vm33 = vcmp.lt.s32.totalorder %v31, 222
  %vm34 = vmand %vm32, %vm33
  %35 = vst.msk [vmem:[#allocation2] ss:$8 sm:$0x3] %vm34, %v30
  %36 = vst.msk [vmem:[#allocation2] ss:$8 sm:$0x0] %vm34, %v30
  %v37 = vld [vmem:[%s0] ss:$4 sm:$0x3]
  %39 = vrot.lane.b32.xlu0 %v37, 127
  %v40 = vpop.permute.xlu0 %39
  %v41 = vrot.slane %v40, 1
  %vm42 = vcmask 1039360
  %v43 = vsel %vm42, %v40, %v41
  %s45 = scalar_lea.vmem [#allocation2], 1
  %46 = vst.msk [vmem:[%s45] ss:$8 sm:$0x3] %vm34, %v43
  %47 = vst.msk [vmem:[%s45] ss:$8 sm:$0x0] %vm34, %v43
  %v48 = vld [vmem:[%s0] ss:$4 sm:$0x3]
  %50 = vrot.lane.b32.xlu0 %v48, 126
  %v51 = vpop.permute.xlu0 %50
  %v52 = vrot.slane %v51, 1
  %vm53 = vcmask 1031168
  %v54 = vsel %vm53, %v51, %v52
  %s56 = scalar_lea.vmem [#allocation2], 2
  %57 = vst.msk [vmem:[%s56] ss:$8 sm:$0x3] %vm34, %v54
  %58 = vst.msk [vmem:[%s56] ss:$8 sm:$0x0] %vm34, %v54
  %v59 = vld [vmem:[%s0] ss:$4 sm:$0x3]
  %61 = vrot.lane.b32.xlu0 %v59, 112
  %v62 = vpop.permute.xlu0 %61
  %v63 = vrot.slane %v62, 1
  %vm64 = vcmask 916480
  %v65 = vsel %vm64, %v62, %v63
  %s67 = scalar_lea.vmem [#allocation2], 3
  %68 = vst.msk [vmem:[%s67] ss:$8 sm:$0x3] %vm34, %v65
  %69 = vst.msk [vmem:[%s67] ss:$8 sm:$0x0] %vm34, %v65
  %v70 = vld [vmem:[%s0] ss:$4 sm:$0x3]
  %72 = vrot.lane.b32.xlu0 %v70, 111
  %v73 = vpop.permute.xlu0 %72
  %v74 = vrot.slane %v73, 1
  %vm75 = vcmask 908288
  %v76 = vsel %vm75, %v73, %v74
  %s78 = scalar_lea.vmem [#allocation2], 4
  %79 = vst.msk [vmem:[%s78] ss:$8 sm:$0x3] %vm34, %v76
  %80 = vst.msk [vmem:[%s78] ss:$8 sm:$0x0] %vm34, %v76
  %v81 = vld [vmem:[%s0] ss:$4 sm:$0x3]
  %83 = vrot.lane.b32.xlu0 %v81, 110
  %v84 = vpop.permute.xlu0 %83
  %v85 = vrot.slane %v84, 1
  %vm86 = vcmask 900096
  %v87 = vsel %vm86, %v84, %v85
  %s89 = scalar_lea.vmem [#allocation2], 5
  %90 = vst.msk [vmem:[%s89] ss:$8 sm:$0x3] %vm34, %v87
  %91 = vst.msk [vmem:[%s89] ss:$8 sm:$0x0] %vm34, %v87
  %v92 = vld [vmem:[%s0] ss:$4 sm:$0x3]
  %94 = vrot.lane.b32.xlu0 %v92, 96
  %v95 = vpop.permute.xlu0 %94
  %v96 = vrot.slane %v95, 1
  %vm97 = vcmask 785408
  %v98 = vsel %vm97, %v95, %v96
  %s100 = scalar_lea.vmem [#allocation2], 6
  %101 = vst.msk [vmem:[%s100] ss:$8 sm:$0x3] %vm34, %v98
  %102 = vst.msk [vmem:[%s100] ss:$8 sm:$0x0] %vm34, %v98
  %v103 = vld [vmem:[%s0] ss:$4 sm:$0x3]
  %105 = vrot.lane.b32.xlu0 %v103, 95
  %v106 = vpop.permute.xlu0 %105
  %v107 = vrot.slane %v106, 1
  %vm108 = vcmask 777216
  %v109 = vsel %vm108, %v106, %v107
  %s111 = scalar_lea.vmem [#allocation2], 7
  %112 = vst.msk [vmem:[%s111] ss:$8 sm:$0x3] %vm34, %v109
  %113 = vst.msk [vmem:[%s111] ss:$8 sm:$0x0] %vm34, %v109
  %v114 = vld [vmem:[%s0] ss:$4 sm:$0x3]
  %116 = vrot.lane.b32.xlu0 %v114, 94
  %v117 = vpop.permute.xlu0 %116
  %v118 = vrot.slane %v117, 1
  %vm119 = vcmask 769024
  %v120 = vsel %vm119, %v117, %v118
  %s122 = scalar_lea.vmem [#allocation2], 32
  %123 = vst.msk [vmem:[%s122] ss:$8 sm:$0x3] %vm34, %v120
  %124 = vst.msk [vmem:[%s122] ss:$8 sm:$0x0] %vm34, %v120
  %s125 = scalar_lea.vmem %s0, 1
  %v126 = vld [vmem:[%s125] ss:$4 sm:$0x3]
  %s127 = scalar_lea.vmem [#allocation2], 33
  %128 = vst.msk [vmem:[%s127] ss:$8 sm:$0x3] %vm34, %v126
  %129 = vst.msk [vmem:[%s127] ss:$8 sm:$0x0] %vm34, %v126
  %v130 = vld [vmem:[%s125] ss:$4 sm:$0x3]
  %132 = vrot.lane.b32.xlu0 %v130, 127
  %v133 = vpop.permute.xlu0 %132
  %v134 = vrot.slane %v133, 1
  %v135 = vsel %vm42, %v133, %v134
  %s137 = scalar_lea.vmem [#allocation2], 34
  %138 = vst.msk [vmem:[%s137] ss:$8 sm:$0x3] %vm34, %v135
  %139 = vst.msk [vmem:[%s137] ss:$8 sm:$0x0] %vm34, %v135
  %v140 = vld [vmem:[%s125] ss:$4 sm:$0x3]
  %142 = vrot.lane.b32.xlu0 %v140, 126
  %v143 = vpop.permute.xlu0 %142
  %v144 = vrot.slane %v143, 1
  %v145 = vsel %vm53, %v143, %v144
  %s147 = scalar_lea.vmem [#allocation2], 35
  %148 = vst.msk [vmem:[%s147] ss:$8 sm:$0x3] %vm34, %v145
  %149 = vst.msk [vmem:[%s147] ss:$8 sm:$0x0] %vm34, %v145
  %v150 = vld [vmem:[%s125] ss:$4 sm:$0x3]
  %152 = vrot.lane.b32.xlu0 %v150, 112
  %v153 = vpop.permute.xlu0 %152
  %v154 = vrot.slane %v153, 1
  %v155 = vsel %vm64, %v153, %v154
  %s157 = scalar_lea.vmem [#allocation2], 36
  %158 = vst.msk [vmem:[%s157] ss:$8 sm:$0x3] %vm34, %v155
  %159 = vst.msk [vmem:[%s157] ss:$8 sm:$0x0] %vm34, %v155
  %v160 = vld [vmem:[%s125] ss:$4 sm:$0x3]
  %162 = vrot.lane.b32.xlu0 %v160, 111
  %v163 = vpop.permute.xlu0 %162
  %v164 = vrot.slane %v163, 1
  %v165 = vsel %vm75, %v163, %v164
  %s167 = scalar_lea.vmem [#allocation2], 37
  %168 = vst.msk [vmem:[%s167] ss:$8 sm:$0x3] %vm34, %v165
  %169 = vst.msk [vmem:[%s167] ss:$8 sm:$0x0] %vm34, %v165
  %v170 = vld [vmem:[%s125] ss:$4 sm:$0x3]
  %172 = vrot.lane.b32.xlu0 %v170, 110
  %v173 = vpop.permute.xlu0 %172
  %v174 = vrot.slane %v173, 1
  %v175 = vsel %vm86, %v173, %v174
  %s177 = scalar_lea.vmem [#allocation2], 38
  %178 = vst.msk [vmem:[%s177] ss:$8 sm:$0x3] %vm34, %v175
  %179 = vst.msk [vmem:[%s177] ss:$8 sm:$0x0] %vm34, %v175
  %v180 = vld [vmem:[%s125] ss:$4 sm:$0x3]
  %182 = vrot.lane.b32.xlu0 %v180, 96
  %v183 = vpop.permute.xlu0 %182
  %v184 = vrot.slane %v183, 1
  %v185 = vsel %vm97, %v183, %v184
  %s187 = scalar_lea.vmem [#allocation2], 39
  %188 = vst.msk [vmem:[%s187] ss:$8 sm:$0x3] %vm34, %v185
  %189 = vst.msk [vmem:[%s187] ss:$8 sm:$0x0] %vm34, %v185
  %v190 = vld [vmem:[%s125] ss:$4 sm:$0x3]
  %192 = vrot.lane.b32.xlu0 %v190, 95
  %v193 = vpop.permute.xlu0 %192
  %v194 = vrot.slane %v193, 1
  %v195 = vsel %vm108, %v193, %v194
  %s197 = scalar_lea.vmem [#allocation2], 64
  %198 = vst.msk [vmem:[%s197] ss:$8 sm:$0x3] %vm34, %v195
  %199 = vst.msk [vmem:[%s197] ss:$8 sm:$0x0] %vm34, %v195
  %v200 = vld [vmem:[%s125] ss:$4 sm:$0x3]
  %202 = vrot.lane.b32.xlu0 %v200, 94
  %v203 = vpop.permute.xlu0 %202
  %v204 = vrot.slane %v203, 1
  %v205 = vsel %vm119, %v203, %v204
  %s207 = scalar_lea.vmem [#allocation2], 65
  %208 = vst.msk [vmem:[%s207] ss:$8 sm:$0x3] %vm34, %v205
  %209 = vst.msk [vmem:[%s207] ss:$8 sm:$0x0] %vm34, %v205
  %s210 = scalar_lea.vmem %s0, 2
  %v211 = vld [vmem:[%s210] ss:$4 sm:$0x3]
  %s212 = scalar_lea.vmem [#allocation2], 66
  %213 = vst.msk [vmem:[%s212] ss:$8 sm:$0x3] %vm34, %v211
  %214 = vst.msk [vmem:[%s212] ss:$8 sm:$0x0] %vm34, %v211
  %v215 = vld [vmem:[%s210] ss:$4 sm:$0x3]
  %217 = vrot.lane.b32.xlu0 %v215, 127
  %v218 = vpop.permute.xlu0 %217
  %v219 = vrot.slane %v218, 1
  %v220 = vsel %vm42, %v218, %v219
  %s222 = scalar_lea.vmem [#allocation2], 67
  %223 = vst.msk [vmem:[%s222] ss:$8 sm:$0x3] %vm34, %v220
  %224 = vst.msk [vmem:[%s222] ss:$8 sm:$0x0] %vm34, %v220
  %v225 = vld [vmem:[%s210] ss:$4 sm:$0x3]
  %227 = vrot.lane.b32.xlu0 %v225, 126
  %v228 = vpop.permute.xlu0 %227
  %v229 = vrot.slane %v228, 1
  %v230 = vsel %vm53, %v228, %v229
  %s232 = scalar_lea.vmem [#allocation2], 68
  %233 = vst.msk [vmem:[%s232] ss:$8 sm:$0x3] %vm34, %v230
  %234 = vst.msk [vmem:[%s232] ss:$8 sm:$0x0] %vm34, %v230
  %v235 = vld [vmem:[%s210] ss:$4 sm:$0x3]
  %237 = vrot.lane.b32.xlu0 %v235, 112
  %v238 = vpop.permute.xlu0 %237
  %v239 = vrot.slane %v238, 1
  %v240 = vsel %vm64, %v238, %v239
  %s242 = scalar_lea.vmem [#allocation2], 69
  %243 = vst.msk [vmem:[%s242] ss:$8 sm:$0x3] %vm34, %v240
  %244 = vst.msk [vmem:[%s242] ss:$8 sm:$0x0] %vm34, %v240
  %v245 = vld [vmem:[%s210] ss:$4 sm:$0x3]
  %247 = vrot.lane.b32.xlu0 %v245, 111
  %v248 = vpop.permute.xlu0 %247
  %v249 = vrot.slane %v248, 1
  %v250 = vsel %vm75, %v248, %v249
  %s252 = scalar_lea.vmem [#allocation2], 70
  %253 = vst.msk [vmem:[%s252] ss:$8 sm:$0x3] %vm34, %v250
  %254 = vst.msk [vmem:[%s252] ss:$8 sm:$0x0] %vm34, %v250
  %v255 = vld [vmem:[%s210] ss:$4 sm:$0x3]
  %257 = vrot.lane.b32.xlu0 %v255, 110
  %v258 = vpop.permute.xlu0 %257
  %v259 = vrot.slane %v258, 1
  %v260 = vsel %vm86, %v258, %v259
  %s262 = scalar_lea.vmem [#allocation2], 71
  %263 = vst.msk [vmem:[%s262] ss:$8 sm:$0x3] %vm34, %v260
  %264 = vst.msk [vmem:[%s262] ss:$8 sm:$0x0] %vm34, %v260
  %v265 = vld [vmem:[%s210] ss:$4 sm:$0x3]
  %267 = vrot.lane.b32.xlu0 %v265, 96
  %v268 = vpop.permute.xlu0 %267
  %v269 = vrot.slane %v268, 1
  %v270 = vsel %vm97, %v268, %v269
  %s272 = scalar_lea.vmem [#allocation2], 96
  %273 = vst.msk [vmem:[%s272] ss:$8 sm:$0x3] %vm34, %v270
  %274 = vst.msk [vmem:[%s272] ss:$8 sm:$0x0] %vm34, %v270
  %v275 = vld [vmem:[%s210] ss:$4 sm:$0x3]
  %277 = vrot.lane.b32.xlu0 %v275, 95
  %v278 = vpop.permute.xlu0 %277
  %v279 = vrot.slane %v278, 1
  %v280 = vsel %vm108, %v278, %v279
  %s282 = scalar_lea.vmem [#allocation2], 97
  %283 = vst.msk [vmem:[%s282] ss:$8 sm:$0x3] %vm34, %v280
  %284 = vst.msk [vmem:[%s282] ss:$8 sm:$0x0] %vm34, %v280
  %v285 = vld [vmem:[%s210] ss:$4 sm:$0x3]
  %287 = vrot.lane.b32.xlu0 %v285, 94
  %v288 = vpop.permute.xlu0 %287
  %v289 = vrot.slane %v288, 1
  %v290 = vsel %vm119, %v288, %v289
  %s292 = scalar_lea.vmem [#allocation2], 98
  %293 = vst.msk [vmem:[%s292] ss:$8 sm:$0x3] %vm34, %v290
  %294 = vst.msk [vmem:[%s292] ss:$8 sm:$0x0] %vm34, %v290
  %s295 = scalar_lea.vmem %s0, 8
  %v296 = vld [vmem:[%s295] ss:$4 sm:$0x3]
  %s297 = scalar_lea.vmem [#allocation2], 16
  %298 = vst.msk [vmem:[%s297] ss:$8 sm:$0x3] %vm34, %v296
  %299 = vst.msk [vmem:[%s297] ss:$8 sm:$0x0] %vm34, %v296
  %v300 = vld [vmem:[%s295] ss:$4 sm:$0x3]
  %302 = vrot.lane.b32.xlu0 %v300, 127
  %v303 = vpop.permute.xlu0 %302
  %v304 = vrot.slane %v303, 1
  %v305 = vsel %vm42, %v303, %v304
  %s307 = scalar_lea.vmem [#allocation2], 17
  %308 = vst.msk [vmem:[%s307] ss:$8 sm:$0x3] %vm34, %v305
  %309 = vst.msk [vmem:[%s307] ss:$8 sm:$0x0] %vm34, %v305
  %v310 = vld [vmem:[%s295] ss:$4 sm:$0x3]
  %312 = vrot.lane.b32.xlu0 %v310, 126
  %v313 = vpop.permute.xlu0 %312
  %v314 = vrot.slane %v313, 1
  %v315 = vsel %vm53, %v313, %v314
  %s317 = scalar_lea.vmem [#allocation2], 18
  %318 = vst.msk [vmem:[%s317] ss:$8 sm:$0x3] %vm34, %v315
  %319 = vst.msk [vmem:[%s317] ss:$8 sm:$0x0] %vm34, %v315
  %v320 = vld [vmem:[%s295] ss:$4 sm:$0x3]
  %322 = vrot.lane.b32.xlu0 %v320, 112
  %v323 = vpop.permute.xlu0 %322
  %v324 = vrot.slane %v323, 1
  %v325 = vsel %vm64, %v323, %v324
  %s327 = scalar_lea.vmem [#allocation2], 19
  %328 = vst.msk [vmem:[%s327] ss:$8 sm:$0x3] %vm34, %v325
  %329 = vst.msk [vmem:[%s327] ss:$8 sm:$0x0] %vm34, %v325
  %v330 = vld [vmem:[%s295] ss:$4 sm:$0x3]
  %332 = vrot.lane.b32.xlu0 %v330, 111
  %v333 = vpop.permute.xlu0 %332
  %v334 = vrot.slane %v333, 1
  %v335 = vsel %vm75, %v333, %v334
  %s337 = scalar_lea.vmem [#allocation2], 20
  %338 = vst.msk [vmem:[%s337] ss:$8 sm:$0x3] %vm34, %v335
  %339 = vst.msk [vmem:[%s337] ss:$8 sm:$0x0] %vm34, %v335
  %v340 = vld [vmem:[%s295] ss:$4 sm:$0x3]
  %342 = vrot.lane.b32.xlu0 %v340, 110
  %v343 = vpop.permute.xlu0 %342
  %v344 = vrot.slane %v343, 1
  %v345 = vsel %vm86, %v343, %v344
  %s347 = scalar_lea.vmem [#allocation2], 21
  %348 = vst.msk [vmem:[%s347] ss:$8 sm:$0x3] %vm34, %v345
  %349 = vst.msk [vmem:[%s347] ss:$8 sm:$0x0] %vm34, %v345
  %v350 = vld [vmem:[%s295] ss:$4 sm:$0x3]
  %352 = vrot.lane.b32.xlu0 %v350, 96
  %v353 = vpop.permute.xlu0 %352
  %v354 = vrot.slane %v353, 1
  %v355 = vsel %vm97, %v353, %v354
  %s357 = scalar_lea.vmem [#allocation2], 22
  %358 = vst.msk [vmem:[%s357] ss:$8 sm:$0x3] %vm34, %v355
  %359 = vst.msk [vmem:[%s357] ss:$8 sm:$0x0] %vm34, %v355
  %v360 = vld [vmem:[%s295] ss:$4 sm:$0x3]
  %362 = vrot.lane.b32.xlu0 %v360, 95
  %v363 = vpop.permute.xlu0 %362
  %v364 = vrot.slane %v363, 1
  %v365 = vsel %vm108, %v363, %v364
  %s367 = scalar_lea.vmem [#allocation2], 23
  %368 = vst.msk [vmem:[%s367] ss:$8 sm:$0x3] %vm34, %v365
  %369 = vst.msk [vmem:[%s367] ss:$8 sm:$0x0] %vm34, %v365
  %v370 = vld [vmem:[%s295] ss:$4 sm:$0x3]
  %372 = vrot.lane.b32.xlu0 %v370, 94
  %v373 = vpop.permute.xlu0 %372
  %v374 = vrot.slane %v373, 1
  %v375 = vsel %vm119, %v373, %v374
  %s377 = scalar_lea.vmem [#allocation2], 48
  %378 = vst.msk [vmem:[%s377] ss:$8 sm:$0x3] %vm34, %v375
  %379 = vst.msk [vmem:[%s377] ss:$8 sm:$0x0] %vm34, %v375
  %s380 = scalar_lea.vmem %s295, 1
  %v381 = vld [vmem:[%s380] ss:$4 sm:$0x3]
  %s382 = scalar_lea.vmem [#allocation2], 49
  %383 = vst.msk [vmem:[%s382] ss:$8 sm:$0x3] %vm34, %v381
  %384 = vst.msk [vmem:[%s382] ss:$8 sm:$0x0] %vm34, %v381
  %v385 = vld [vmem:[%s380] ss:$4 sm:$0x3]
  %387 = vrot.lane.b32.xlu0 %v385, 127
  %v388 = vpop.permute.xlu0 %387
  %v389 = vrot.slane %v388, 1
  %v390 = vsel %vm42, %v388, %v389
  %s392 = scalar_lea.vmem [#allocation2], 50
  %393 = vst.msk [vmem:[%s392] ss:$8 sm:$0x3] %vm34, %v390
  %394 = vst.msk [vmem:[%s392] ss:$8 sm:$0x0] %vm34, %v390
  %v395 = vld [vmem:[%s380] ss:$4 sm:$0x3]
  %397 = vrot.lane.b32.xlu0 %v395, 126
  %v398 = vpop.permute.xlu0 %397
  %v399 = vrot.slane %v398, 1
  %v400 = vsel %vm53, %v398, %v399
  %s402 = scalar_lea.vmem [#allocation2], 51
  %403 = vst.msk [vmem:[%s402] ss:$8 sm:$0x3] %vm34, %v400
  %404 = vst.msk [vmem:[%s402] ss:$8 sm:$0x0] %vm34, %v400
  %v405 = vld [vmem:[%s380] ss:$4 sm:$0x3]
  %407 = vrot.lane.b32.xlu0 %v405, 112
  %v408 = vpop.permute.xlu0 %407
  %v409 = vrot.slane %v408, 1
  %v410 = vsel %vm64, %v408, %v409
  %s412 = scalar_lea.vmem [#allocation2], 52
  %413 = vst.msk [vmem:[%s412] ss:$8 sm:$0x3] %vm34, %v410
  %414 = vst.msk [vmem:[%s412] ss:$8 sm:$0x0] %vm34, %v410
  %v415 = vld [vmem:[%s380] ss:$4 sm:$0x3]
  %417 = vrot.lane.b32.xlu0 %v415, 111
  %v418 = vpop.permute.xlu0 %417
  %v419 = vrot.slane %v418, 1
  %v420 = vsel %vm75, %v418, %v419
  %s422 = scalar_lea.vmem [#allocation2], 53
  %423 = vst.msk [vmem:[%s422] ss:$8 sm:$0x3] %vm34, %v420
  %424 = vst.msk [vmem:[%s422] ss:$8 sm:$0x0] %vm34, %v420
  %v425 = vld [vmem:[%s380] ss:$4 sm:$0x3]
  %427 = vrot.lane.b32.xlu0 %v425, 110
  %v428 = vpop.permute.xlu0 %427
  %v429 = vrot.slane %v428, 1
  %v430 = vsel %vm86, %v428, %v429
  %s432 = scalar_lea.vmem [#allocation2], 54
  %433 = vst.msk [vmem:[%s432] ss:$8 sm:$0x3] %vm34, %v430
  %434 = vst.msk [vmem:[%s432] ss:$8 sm:$0x0] %vm34, %v430
  %v435 = vld [vmem:[%s380] ss:$4 sm:$0x3]
  %437 = vrot.lane.b32.xlu0 %v435, 96
  %v438 = vpop.permute.xlu0 %437
  %v439 = vrot.slane %v438, 1
  %v440 = vsel %vm97, %v438, %v439
  %s442 = scalar_lea.vmem [#allocation2], 55
  %443 = vst.msk [vmem:[%s442] ss:$8 sm:$0x3] %vm34, %v440
  %444 = vst.msk [vmem:[%s442] ss:$8 sm:$0x0] %vm34, %v440
  %v445 = vld [vmem:[%s380] ss:$4 sm:$0x3]
  %447 = vrot.lane.b32.xlu0 %v445, 95
  %v448 = vpop.permute.xlu0 %447
  %v449 = vrot.slane %v448, 1
  %v450 = vsel %vm108, %v448, %v449
  %s452 = scalar_lea.vmem [#allocation2], 80
  %453 = vst.msk [vmem:[%s452] ss:$8 sm:$0x3] %vm34, %v450
  %454 = vst.msk [vmem:[%s452] ss:$8 sm:$0x0] %vm34, %v450
  %v455 = vld [vmem:[%s380] ss:$4 sm:$0x3]
  %457 = vrot.lane.b32.xlu0 %v455, 94
  %v458 = vpop.permute.xlu0 %457
  %v459 = vrot.slane %v458, 1
  %v460 = vsel %vm119, %v458, %v459
  %s462 = scalar_lea.vmem [#allocation2], 81
  %463 = vst.msk [vmem:[%s462] ss:$8 sm:$0x3] %vm34, %v460
  %464 = vst.msk [vmem:[%s462] ss:$8 sm:$0x0] %vm34, %v460
  %s465 = scalar_lea.vmem %s295, 2
  %v466 = vld [vmem:[%s465] ss:$4 sm:$0x3]
  %s467 = scalar_lea.vmem [#allocation2], 82
  %468 = vst.msk [vmem:[%s467] ss:$8 sm:$0x3] %vm34, %v466
  %469 = vst.msk [vmem:[%s467] ss:$8 sm:$0x0] %vm34, %v466
  %v470 = vld [vmem:[%s465] ss:$4 sm:$0x3]
  %472 = vrot.lane.b32.xlu0 %v470, 127
  %v473 = vpop.permute.xlu0 %472
  %v474 = vrot.slane %v473, 1
  %v475 = vsel %vm42, %v473, %v474
  %s477 = scalar_lea.vmem [#allocation2], 83
  %478 = vst.msk [vmem:[%s477] ss:$8 sm:$0x3] %vm34, %v475
  %479 = vst.msk [vmem:[%s477] ss:$8 sm:$0x0] %vm34, %v475
  %v480 = vld [vmem:[%s465] ss:$4 sm:$0x3]
  %482 = vrot.lane.b32.xlu0 %v480, 126
  %v483 = vpop.permute.xlu0 %482
  %v484 = vrot.slane %v483, 1
  %v485 = vsel %vm53, %v483, %v484
  %s487 = scalar_lea.vmem [#allocation2], 84
  %488 = vst.msk [vmem:[%s487] ss:$8 sm:$0x3] %vm34, %v485
  %489 = vst.msk [vmem:[%s487] ss:$8 sm:$0x0] %vm34, %v485
  %v490 = vld [vmem:[%s465] ss:$4 sm:$0x3]
  %492 = vrot.lane.b32.xlu0 %v490, 112
  %v493 = vpop.permute.xlu0 %492
  %v494 = vrot.slane %v493, 1
  %v495 = vsel %vm64, %v493, %v494
  %s497 = scalar_lea.vmem [#allocation2], 85
  %498 = vst.msk [vmem:[%s497] ss:$8 sm:$0x3] %vm34, %v495
  %499 = vst.msk [vmem:[%s497] ss:$8 sm:$0x0] %vm34, %v495
  %v500 = vld [vmem:[%s465] ss:$4 sm:$0x3]
  %502 = vrot.lane.b32.xlu0 %v500, 111
  %v503 = vpop.permute.xlu0 %502
  %v504 = vrot.slane %v503, 1
  %v505 = vsel %vm75, %v503, %v504
  %s507 = scalar_lea.vmem [#allocation2], 86
  %508 = vst.msk [vmem:[%s507] ss:$8 sm:$0x3] %vm34, %v505
  %509 = vst.msk [vmem:[%s507] ss:$8 sm:$0x0] %vm34, %v505
  %v510 = vld [vmem:[%s465] ss:$4 sm:$0x3]
  %512 = vrot.lane.b32.xlu0 %v510, 110
  %v513 = vpop.permute.xlu0 %512
  %v514 = vrot.slane %v513, 1
  %v515 = vsel %vm86, %v513, %v514
  %s517 = scalar_lea.vmem [#allocation2], 87
  %518 = vst.msk [vmem:[%s517] ss:$8 sm:$0x3] %vm34, %v515
  %519 = vst.msk [vmem:[%s517] ss:$8 sm:$0x0] %vm34, %v515
  %v520 = vld [vmem:[%s465] ss:$4 sm:$0x3]
  %522 = vrot.lane.b32.xlu0 %v520, 96
  %v523 = vpop.permute.xlu0 %522
  %v524 = vrot.slane %v523, 1
  %v525 = vsel %vm97, %v523, %v524
  %s527 = scalar_lea.vmem [#allocation2], 112
  %528 = vst.msk [vmem:[%s527] ss:$8 sm:$0x3] %vm34, %v525
  %529 = vst.msk [vmem:[%s527] ss:$8 sm:$0x0] %vm34, %v525
  %v530 = vld [vmem:[%s465] ss:$4 sm:$0x3]
  %532 = vrot.lane.b32.xlu0 %v530, 95
  %v533 = vpop.permute.xlu0 %532
  %v534 = vrot.slane %v533, 1
  %v535 = vsel %vm108, %v533, %v534
  %s537 = scalar_lea.vmem [#allocation2], 113
  %538 = vst.msk [vmem:[%s537] ss:$8 sm:$0x3] %vm34, %v535
  %539 = vst.msk [vmem:[%s537] ss:$8 sm:$0x0] %vm34, %v535
  %v540 = vld [vmem:[%s465] ss:$4 sm:$0x3]
  %542 = vrot.lane.b32.xlu0 %v540, 94
  %v543 = vpop.permute.xlu0 %542
  %v544 = vrot.slane %v543, 1
  %v545 = vsel %vm119, %v543, %v544
  %s547 = scalar_lea.vmem [#allocation2], 114
  %548 = vst.msk [vmem:[%s547] ss:$8 sm:$0x3] %vm34, %v545
  %549 = vst.msk [vmem:[%s547] ss:$8 sm:$0x0] %vm34, %v545
  %v550 = vld [vmem:[%s1] sm:$0x3f]
  %v551 = vld [vmem:[#allocation2] sm:$0xff]
  %v552 = vld [vmem:[#allocation2 + $0x8] sm:$0xff]
  %v553 = vld [vmem:[#allocation2 + $0x10] sm:$0xff]
  %v554 = vld [vmem:[#allocation2 + $0x18] sm:$0xff]
  %v555 = vld [vmem:[#allocation2 + $0x20] sm:$0xff]
  %v556 = vld [vmem:[#allocation2 + $0x28] sm:$0xff]
  %v557 = vld [vmem:[#allocation2 + $0x30] sm:$0xff]
  %v558 = vld [vmem:[#allocation2 + $0x38] sm:$0xff]
  %v559 = vld [vmem:[#allocation2 + $0x40] sm:$0xff]
  %v560 = vld [vmem:[#allocation2 + $0x48] sm:$0xff]
  %v561 = vld [vmem:[#allocation2 + $0x50] sm:$0xff]
  %v562 = vld [vmem:[#allocation2 + $0x58] sm:$0xff]
  %v563 = vld [vmem:[#allocation2 + $0x60] sm:$0x7]
  %v564 = vld [vmem:[#allocation2 + $0x68] sm:$0x7]
  %v565 = vld [vmem:[#allocation2 + $0x70] sm:$0x7]
  %v566 = vld [vmem:[#allocation2 + $0x78] sm:$0x7]
  %v567 = vld [vmem:[%s2] sm:$0x3f]
  %569 = vset.pattern.permute.xlu0 0
  %570 = vperm.xlu0 %569, %v567
  %v571 = vpop.permute.xlu0 %570
  %vm573 = vcmask 220160
  %v575 = vsel %vm573, %v550, 0
  %vm577 = vcmask 1042432
  %v579 = vsel %vm577, %v563, 0
  %v582 = vsel %vm577, %v564, 0
  %v585 = vsel %vm577, %v565, 0
  %v588 = vsel %vm577, %v566, 0
  %590 = vmatprep.subr.mxu0 %v552
  %591 = vmatpush1.msra.mxu0 %v551
  %592 = vmatprep.subr.mxu0 %v556
  %593 = vmatpush1.msra.mxu0 %v555
  %594 = vmatprep.subr.mxu0 %v560
  %595 = vmatpush1.msra.mxu0 %v559
  %596 = vmatprep.subr.mxu0 %v582
  %597 = vmatpush1.msra.mxu0 %v579
  %598 = vmatprep.subr.mxu0 0.0
  %599 = vmatpush1.msra.mxu0 0.0
  %600 = vmatprep.subr.mxu0 0.0
  %601 = vmatpush1.msra.mxu0 0.0
  %602 = vmatprep.subr.mxu0 0.0
  %603 = vmatpush1.msra.mxu0 0.0
  %604 = vmatprep.subr.mxu0 0.0
  %605 = vmatpush1.msra.mxu0 0.0
  %606 = vmatprep.subr.mxu0 0.0
  %607 = vmatpush1.msra.mxu0 0.0
  %608 = vmatprep.subr.mxu0 0.0
  %609 = vmatpush1.msra.mxu0 0.0
  %610 = vmatprep.subr.mxu0 0.0
  %611 = vmatpush1.msra.mxu0 0.0
  %612 = vmatprep.subr.mxu0 0.0
  %613 = vmatpush1.msra.mxu0 0.0
  %614 = vmatprep.subr.mxu0 0.0
  %615 = vmatpush1.msra.mxu0 0.0
  %616 = vmatprep.subr.mxu0 0.0
  %617 = vmatpush1.msra.mxu0 0.0
  %618 = vmatprep.subr.mxu0 0.0
  %619 = vmatpush1.msra.mxu0 0.0
  %620 = vmatprep.subr.mxu0 0.0
  %621 = vmatpush1.msra.mxu0 0.0
  %622 = vmatprep.subr.mxu0 0.0
  %623 = vmatpush1.msra.mxu0 0.0
  %624 = vmatprep.subr.mxu0 0.0
  %625 = vmatpush1.msra.mxu0 0.0
  %626 = vmatprep.subr.mxu0 0.0
  %627 = vmatpush1.msra.mxu0 0.0
  %628 = vmatprep.subr.mxu0 0.0
  %629 = vmatpush1.msra.mxu0 0.0
  %630 = vmatprep.subr.mxu0 0.0
  %631 = vmatpush1.msra.mxu0 0.0
  %632 = vmatprep.subr.mxu0 0.0
  %633 = vmatpush1.msra.mxu0 0.0
  %634 = vmatprep.subr.mxu0 0.0
  %635 = vmatpush1.msra.mxu0 0.0
  %636 = vmatprep.subr.mxu0 0.0
  %637 = vmatpush1.msra.mxu0 0.0
  %638 = vmatprep.subr.mxu0 0.0
  %639 = vmatpush1.msra.mxu0 0.0
  %640 = vmatprep.subr.mxu0 0.0
  %641 = vmatpush1.msra.mxu0 0.0
  %642 = vmatprep.subr.mxu0 0.0
  %643 = vmatpush1.msra.mxu0 0.0
  %644 = vmatprep.subr.mxu0 0.0
  %645 = vmatpush1.msra.mxu0 0.0
  %646 = vmatprep.subr.mxu0 0.0
  %647 = vmatpush1.msra.mxu0 0.0
  %648 = vmatprep.subr.mxu0 0.0
  %649 = vmatpush1.msra.mxu0 0.0
  %650 = vmatprep.subr.mxu0 0.0
  %651 = vmatpush1.msra.mxu0 0.0
  %652 = vmatprep.subr.mxu0 0.0
  %653 = vmatpush1.msra.mxu0 0.0
  %654 = vmatprep.mubr.f32.mxu0 0.0
  %655 = vmatmul.mubr.f32.gmra.mrb[0].mxu0 %v575
  %v656 = vpop.f32.mrb[0].mxu0
  %v657 = vadd.f32 %v571, %v656
  %v658 = vpop.f32.mrb[0].mxu0
  %v659 = vadd.f32 %v571, %v658
  %660 = vdwg.mxu0
  %661 = vmatprep.subr.mxu0 %v554
  %662 = vmatpush1.msra.mxu0 %v553
  %663 = vmatprep.subr.mxu0 %v558
  %664 = vmatpush1.msra.mxu0 %v557
  %665 = vmatprep.subr.mxu0 %v562
  %666 = vmatpush1.msra.mxu0 %v561
  %667 = vmatprep.subr.mxu0 %v588
  %668 = vmatpush1.msra.mxu0 %v585
  %669 = vmatprep.subr.mxu0 0.0
  %670 = vmatpush1.msra.mxu0 0.0
  %671 = vmatprep.subr.mxu0 0.0
  %672 = vmatpush1.msra.mxu0 0.0
  %673 = vmatprep.subr.mxu0 0.0
  %674 = vmatpush1.msra.mxu0 0.0
  %675 = vmatprep.subr.mxu0 0.0
  %676 = vmatpush1.msra.mxu0 0.0
  %677 = vmatprep.subr.mxu0 0.0
  %678 = vmatpush1.msra.mxu0 0.0
  %679 = vmatprep.subr.mxu0 0.0
  %680 = vmatpush1.msra.mxu0 0.0
  %681 = vmatprep.subr.mxu0 0.0
  %682 = vmatpush1.msra.mxu0 0.0
  %683 = vmatprep.subr.mxu0 0.0
  %684 = vmatpush1.msra.mxu0 0.0
  %685 = vmatprep.subr.mxu0 0.0
  %686 = vmatpush1.msra.mxu0 0.0
  %687 = vmatprep.subr.mxu0 0.0
  %688 = vmatpush1.msra.mxu0 0.0
  %689 = vmatprep.subr.mxu0 0.0
  %690 = vmatpush1.msra.mxu0 0.0
  %691 = vmatprep.subr.mxu0 0.0
  %692 = vmatpush1.msra.mxu0 0.0
  %693 = vmatprep.subr.mxu0 0.0
  %694 = vmatpush1.msra.mxu0 0.0
  %695 = vmatprep.subr.mxu0 0.0
  %696 = vmatpush1.msra.mxu0 0.0
  %697 = vmatprep.subr.mxu0 0.0
  %698 = vmatpush1.msra.mxu0 0.0
  %699 = vmatprep.subr.mxu0 0.0
  %700 = vmatpush1.msra.mxu0 0.0
  %701 = vmatprep.subr.mxu0 0.0
  %702 = vmatpush1.msra.mxu0 0.0
  %703 = vmatprep.subr.mxu0 0.0
  %704 = vmatpush1.msra.mxu0 0.0
  %705 = vmatprep.subr.mxu0 0.0
  %706 = vmatpush1.msra.mxu0 0.0
  %707 = vmatprep.subr.mxu0 0.0
  %708 = vmatpush1.msra.mxu0 0.0
  %709 = vmatprep.subr.mxu0 0.0
  %710 = vmatpush1.msra.mxu0 0.0
  %711 = vmatprep.subr.mxu0 0.0
  %712 = vmatpush1.msra.mxu0 0.0
  %713 = vmatprep.subr.mxu0 0.0
  %714 = vmatpush1.msra.mxu0 0.0
  %715 = vmatprep.subr.mxu0 0.0
  %716 = vmatpush1.msra.mxu0 0.0
  %717 = vmatprep.subr.mxu0 0.0
  %718 = vmatpush1.msra.mxu0 0.0
  %719 = vmatprep.subr.mxu0 0.0
  %720 = vmatpush1.msra.mxu0 0.0
  %721 = vmatprep.subr.mxu0 0.0
  %722 = vmatpush1.msra.mxu0 0.0
  %723 = vmatprep.subr.mxu0 0.0
  %724 = vmatpush1.msra.mxu0 0.0
  %725 = vmatprep.mubr.f32.mxu0 0.0
  %726 = vmatmul.mubr.f32.gmra.mrb[0].mxu0 %v575
  %v727 = vpop.f32.mrb[0].mxu0
  %v728 = vadd.f32 %v571, %v727
  %v729 = vpop.f32.mrb[0].mxu0
  %v730 = vadd.f32 %v571, %v729
  %731 = vdwg.mxu0
  %732 = vst [vmem:[#allocation3] sm:$0x3f] %v657
  %733 = vst [vmem:[#allocation3 + $0x8] sm:$0x3f] %v659
  %734 = vst [vmem:[#allocation3 + $0x10] sm:$0x3f] %v728
  %735 = vst [vmem:[#allocation3 + $0x18] sm:$0x3f] %v730
  %v736 = vld [vmem:[#allocation3] sm:$0x3f]
  %vm737 = vcmask 111616
  %738 = vst.msk [vmem:[%s3] sm:$0x3f] %vm737, %v736
  %v739 = vld [vmem:[#allocation3] sm:$0x3f]
  %741 = vrot.lane.b32.xlu0 %v739, 126
  %v742 = vpop.permute.xlu0 %741
  %vm744 = vcmask 226416
  %745 = vst.msk [vmem:[%s3] sm:$0x3f] %vm744, %v742
  %v746 = vld [vmem:[#allocation3] sm:$0x3f]
  %748 = vrot.lane.b32.xlu0 %v746, 124
  %v749 = vpop.permute.xlu0 %748
  %vm751 = vcmask 341216
  %752 = vst.msk [vmem:[%s3] sm:$0x3f] %vm751, %v749
  %v753 = vld [vmem:[#allocation3] sm:$0x3f]
  %755 = vrot.lane.b32.xlu0 %v753, 122
  %v756 = vpop.permute.xlu0 %755
  %vm758 = vcmask 456016
  %759 = vst.msk [vmem:[%s3] sm:$0x3f] %vm758, %v756
  %v760 = vld [vmem:[#allocation3] sm:$0x3f]
  %762 = vrot.lane.b32.xlu0 %v760, 120
  %v763 = vpop.permute.xlu0 %762
  %vm765 = vcmask 570816
  %766 = vst.msk [vmem:[%s3] sm:$0x3f] %vm765, %v763
  %v767 = vld [vmem:[#allocation3] sm:$0x3f]
  %769 = vrot.lane.b32.xlu0 %v767, 118
  %v770 = vpop.permute.xlu0 %769
  %vm772 = vcmask 685616
  %773 = vst.msk [vmem:[%s3] sm:$0x3f] %vm772, %v770
  %v774 = vld [vmem:[#allocation3] sm:$0x3f]
  %776 = vrot.lane.b32.xlu0 %v774, 116
  %v777 = vpop.permute.xlu0 %776
  %vm779 = vcmask 800416
  %780 = vst.msk [vmem:[%s3] sm:$0x3f] %vm779, %v777
  %v781 = vld [vmem:[#allocation3] sm:$0x3f]
  %783 = vrot.lane.b32.xlu0 %v781, 114
  %v784 = vpop.permute.xlu0 %783
  %vm786 = vcmask 915216
  %787 = vst.msk [vmem:[%s3] sm:$0x3f] %vm786, %v784
  %v788 = vld [vmem:[#allocation3 + $0x8] sm:$0x3f]
  %790 = vrot.lane.b32.xlu0 %v788, 112
  %v791 = vpop.permute.xlu0 %790
  %vm793 = vcmask 1030016
  %794 = vst.msk [vmem:[%s3] sm:$0x3f] %vm793, %v791
  %v795 = vld [vmem:[#allocation3 + $0x8] sm:$0x3f]
  %797 = vrot.lane.b32.xlu0 %v795, 110
  %v798 = vpop.permute.xlu0 %797
  %vm800 = vcmask 1046512
  %801 = vst.msk [vmem:[%s3] sm:$0x3f] %vm800, %v798
  %vm802 = vcmask 95232
  %803 = vst.msk [vmem:[%s3 + $0x8] sm:$0x3f] %vm802, %v798
  %v804 = vld [vmem:[#allocation3 + $0x8] sm:$0x3f]
  %806 = vrot.lane.b32.xlu0 %v804, 108
  %v807 = vpop.permute.xlu0 %806
  %vm809 = vcmask 210016
  %810 = vst.msk [vmem:[%s3 + $0x8] sm:$0x3f] %vm809, %v807
  %v811 = vld [vmem:[#allocation3 + $0x8] sm:$0x3f]
  %813 = vrot.lane.b32.xlu0 %v811, 106
  %v814 = vpop.permute.xlu0 %813
  %vm816 = vcmask 324816
  %817 = vst.msk [vmem:[%s3 + $0x8] sm:$0x3f] %vm816, %v814
  %v818 = vld [vmem:[#allocation3 + $0x8] sm:$0x3f]
  %820 = vrot.lane.b32.xlu0 %v818, 104
  %v821 = vpop.permute.xlu0 %820
  %vm823 = vcmask 439616
  %824 = vst.msk [vmem:[%s3 + $0x8] sm:$0x3f] %vm823, %v821
  %v825 = vld [vmem:[#allocation3 + $0x8] sm:$0x3f]
  %827 = vrot.lane.b32.xlu0 %v825, 102
  %v828 = vpop.permute.xlu0 %827
  %vm830 = vcmask 554416
  %831 = vst.msk [vmem:[%s3 + $0x8] sm:$0x3f] %vm830, %v828
  %v832 = vld [vmem:[#allocation3 + $0x10] sm:$0x3f]
  %s833 = scalar_lea.vmem %s3, 16
  %834 = vst.msk [vmem:[%s833] sm:$0x3f] %vm737, %v832
  %v835 = vld [vmem:[#allocation3 + $0x10] sm:$0x3f]
  %837 = vrot.lane.b32.xlu0 %v835, 126
  %v838 = vpop.permute.xlu0 %837
  %840 = vst.msk [vmem:[%s833] sm:$0x3f] %vm744, %v838
  %v841 = vld [vmem:[#allocation3 + $0x10] sm:$0x3f]
  %843 = vrot.lane.b32.xlu0 %v841, 124
  %v844 = vpop.permute.xlu0 %843
  %846 = vst.msk [vmem:[%s833] sm:$0x3f] %vm751, %v844
  %v847 = vld [vmem:[#allocation3 + $0x10] sm:$0x3f]
  %849 = vrot.lane.b32.xlu0 %v847, 122
  %v850 = vpop.permute.xlu0 %849
  %852 = vst.msk [vmem:[%s833] sm:$0x3f] %vm758, %v850
  %v853 = vld [vmem:[#allocation3 + $0x10] sm:$0x3f]
  %855 = vrot.lane.b32.xlu0 %v853, 120
  %v856 = vpop.permute.xlu0 %855
  %858 = vst.msk [vmem:[%s833] sm:$0x3f] %vm765, %v856
  %v859 = vld [vmem:[#allocation3 + $0x10] sm:$0x3f]
  %861 = vrot.lane.b32.xlu0 %v859, 118
  %v862 = vpop.permute.xlu0 %861
  %864 = vst.msk [vmem:[%s833] sm:$0x3f] %vm772, %v862
  %v865 = vld [vmem:[#allocation3 + $0x10] sm:$0x3f]
  %867 = vrot.lane.b32.xlu0 %v865, 116
  %v868 = vpop.permute.xlu0 %867
  %870 = vst.msk [vmem:[%s833] sm:$0x3f] %vm779, %v868
  %v871 = vld [vmem:[#allocation3 + $0x10] sm:$0x3f]
  %873 = vrot.lane.b32.xlu0 %v871, 114
  %v874 = vpop.permute.xlu0 %873
  %876 = vst.msk [vmem:[%s833] sm:$0x3f] %vm786, %v874
  %v877 = vld [vmem:[#allocation3 + $0x18] sm:$0x3f]
  %879 = vrot.lane.b32.xlu0 %v877, 112
  %v880 = vpop.permute.xlu0 %879
  %882 = vst.msk [vmem:[%s833] sm:$0x3f] %vm793, %v880
  %v883 = vld [vmem:[#allocation3 + $0x18] sm:$0x3f]
  %885 = vrot.lane.b32.xlu0 %v883, 110
  %v886 = vpop.permute.xlu0 %885
  %888 = vst.msk [vmem:[%s833] sm:$0x3f] %vm800, %v886
  %889 = vst.msk [vmem:[%s833 + $0x8] sm:$0x3f] %vm802, %v886
  %v890 = vld [vmem:[#allocation3 + $0x18] sm:$0x3f]
  %892 = vrot.lane.b32.xlu0 %v890, 108
  %v893 = vpop.permute.xlu0 %892
  %895 = vst.msk [vmem:[%s833 + $0x8] sm:$0x3f] %vm809, %v893
  %v896 = vld [vmem:[#allocation3 + $0x18] sm:$0x3f]
  %898 = vrot.lane.b32.xlu0 %v896, 106
  %v899 = vpop.permute.xlu0 %898
  %901 = vst.msk [vmem:[%s833 + $0x8] sm:$0x3f] %vm816, %v899
  %v902 = vld [vmem:[#allocation3 + $0x18] sm:$0x3f]
  %904 = vrot.lane.b32.xlu0 %v902, 104
  %v905 = vpop.permute.xlu0 %904
  %907 = vst.msk [vmem:[%s833 + $0x8] sm:$0x3f] %vm823, %v905
  %v908 = vld [vmem:[#allocation3 + $0x18] sm:$0x3f]
  %910 = vrot.lane.b32.xlu0 %v908, 102
  %v911 = vpop.permute.xlu0 %910
  %913 = vst.msk [vmem:[%s833 + $0x8] sm:$0x3f] %vm830, %v911
  // Predicated region
  $region14: #{conv2d_pallas.1} parent=0 // pred_check
    _
  $region15: #{conv2d_pallas.1} parent=0 // pred_check_branch
    %915 = sbr.rel (0) target = $region17
  $region16: #{conv2d_pallas.1} parent=0 // pred_region
    _
  $region17: #{conv2d_pallas.1} parent=0 // pred_fallthru
    _
  // Predicated region
  $region18: #{conv2d_pallas.1} parent=0 // pred_check
    _
  $region19: #{conv2d_pallas.1} parent=0 // pred_check_branch
    %917 = sbr.rel (0) target = $region21
  $region20: #{conv2d_pallas.1} parent=0 // pred_region
    _
  $region21: #{conv2d_pallas.1} parent=0 // pred_fallthru
    _

</llo_original>
